<compile_context>
chip_gen: v5e
topology: v5e:2x2
jax: 0.10.0
libtpu: 0.0.40
codegen_flags: <defaults>
</compile_context>

<pallas_src>
import math
import jax
import jax.numpy as jnp
from jax import lax
from jax.experimental import pallas as pl
from jax.experimental.pallas import tpu as pltpu


_INV_SQRT2 = 1.0 / math.sqrt(2.0)


def _round_up(x, m):
    return (x + m - 1) // m * m


def _ffn_kernel(x_ref, w1_ref, b1_ref, w2_ref, b2_ref, o_ref, acc_ref):
    # x_ref : (1, C, TP)  input dtype      w1_ref: (TH, C)  bf16
    # b1_ref: (TH, 1) f32                  w2_ref: (C, TH)  bf16
    # b2_ref: (C, 1)  f32                  o_ref : (1, C, TP) output dtype
    # acc_ref: (C, TP) f32 scratch accumulator (resident across hidden axis)
    hk = pl.program_id(2)

    @pl.when(hk == 0)
    def _():
        acc_ref[...] = jnp.zeros_like(acc_ref)

    x = x_ref[0].astype(jnp.bfloat16)                      # (C, TP) bf16 operand

    # 1x1 conv #1 (this hidden chunk): channels contract, pixels stay on lanes.
    h = jnp.dot(w1_ref[...], x, preferred_element_type=jnp.float32)   # (TH, TP)
    h = h + b1_ref[...]

    # Exact (erf-based) GELU, matching torch.nn.GELU() default; f32 epilogue.
    h = 0.5 * h * (1.0 + lax.erf(h * _INV_SQRT2))

    # TODO(synk): nn.Dropout(0.01) is identity in eval mode; training-mode
    # stochastic dropout (pltpu.prng_seed / prng_random_bits) is not implemented.

    # 1x1 conv #2 (this hidden chunk), accumulated in f32.
    acc_ref[...] += jnp.dot(w2_ref[...], h.astype(jnp.bfloat16),
                            preferred_element_type=jnp.float32)

    @pl.when(hk == pl.num_programs(2) - 1)
    def _():
        o_ref[0] = (acc_ref[...] + b2_ref[...]).astype(o_ref.dtype)


def feedforward_pallas(x_nchw, w1, b1, w2, b2, *, out_dtype=None):
    """FeedForward forward pass.

    x_nchw: (B, dim, H, W).  w1: (hidden, dim), w2: (dim, hidden) are the
    weight-norm-resolved 1x1 conv weights (spatial kernel dims squeezed);
    b1: (hidden,), b2: (dim,).
    """
    B, C, H, W = x_nchw.shape
    hidden = w1.shape[0]
    assert w1.shape == (hidden, C) and w2.shape == (C, hidden)
    assert b1.shape == (hidden,) and b2.shape == (C,)
    out_dtype = x_nchw.dtype if out_dtype is None else jnp.dtype(out_dtype)

    # ---- generation-aware VMEM budget -----------------------------------
    try:
        phys_vmem = int(pltpu.get_tpu_info().vmem_capacity_bytes)
    except Exception:
        phys_vmem = 64 * 1024 * 1024          # conservative (v7x per-TC)
    vmem_cap = int(0.75 * phys_vmem)

    # ---- pixel tiling: pad only to the 128-lane granularity --------------
    P = H * W
    P_pad = _round_up(P, 128)                 # at most 127 padded pixels
    target_tp = 1024 if phys_vmem >= 96 * 1024 * 1024 else 512
    tp = 128
    for cand in range(min(target_tp, P_pad), 127, -128):
        if P_pad % cand == 0:
            tp = cand
            break
    # v7x megacore: prefer >=2 parallel tiles so both TensorCores get work.
    while B * (P_pad // tp) < 2 and tp >= 256 and (tp // 2) % 128 == 0 \
            and P_pad % (tp // 2) == 0:
        tp //= 2
    n_p = P_pad // tp

    # ---- hidden-axis chunking (256-aligned where possible) ---------------
    if hidden <= 512:
        th = hidden
    else:
        th = next((c for c in (512, 256, 128) if hidden % c == 0), hidden)
    n_h = hidden // th

    # ---- operand prep -----------------------------------------------------
    x3 = x_nchw.reshape(B, C, P)              # free view; stays NCHW-native
    if P_pad != P:
        x3 = jnp.pad(x3, ((0, 0), (0, 0), (0, P_pad - P)))

    w1_k = w1.astype(jnp.bfloat16)            # (hidden, C)
    w2_k = w2.astype(jnp.bfloat16)            # (C, hidden)
    b1_k = b1.reshape(hidden, 1).astype(jnp.float32)
    b2_k = b2.reshape(C, 1).astype(jnp.float32)

    # ---- VMEM estimate (lane-padded bias blocks included) ----------------
    xb = x3.dtype.itemsize
    ob = out_dtype.itemsize
    wbuf = 1 if n_h == 1 else 2               # weight chunks single- or double-buffered
    est = (C * tp * xb * 2                    # x tile, double buffered
           + C * tp * ob * 2                  # out tile, double buffered
           + 2 * th * C * 2 * wbuf            # bf16 w1/w2 chunks
           + _round_up(th, 8) * 128 * 4 * wbuf  # b1 chunk (lane-padded)
           + _round_up(C, 8) * 128 * 4        # b2 (single buffered)
           + C * tp * 4                       # f32 accumulator scratch
           + th * tp * 4 * 2)                 # hidden intermediate headroom
    vmem_limit = int(min(vmem_cap, max(32 * 1024 * 1024, 2 * est)))

    cost = pl.CostEstimate(
        flops=4 * B * P_pad * C * hidden,
        transcendentals=B * P_pad * hidden,
        bytes_accessed=(x3.size * xb + B * C * P_pad * ob
                        + (w1_k.size + w2_k.size) * 2 + (hidden + C) * 4))

    def _call(use_pipeline_mode):
        def spec(shape, imap, mode):
            if use_pipeline_mode and mode is not None:
                return pl.BlockSpec(shape, imap, pipeline_mode=mode)
            return pl.BlockSpec(shape, imap)

        # Single-buffer operands whose block index never changes; weight
        # chunks keep the default double-buffer when the hidden axis iterates
        # (so the next chunk's DMA overlaps the current chunk's compute).
        w_mode = pl.Buffered(1) if n_h == 1 else None
        b2_mode = pl.Buffered(1)

        grid_spec = pltpu.PrefetchScalarGridSpec(
            num_scalar_prefetch=0,
            grid=(B, n_p, n_h),
            in_specs=[
                spec((1, C, tp), lambda b, p, h: (b, 0, p), None),   # x tile
                spec((th, C), lambda b, p, h: (h, 0), w_mode),       # w1 chunk
                spec((th, 1), lambda b, p, h: (h, 0), w_mode),       # b1 chunk
                spec((C, th), lambda b, p, h: (0, h), w_mode),       # w2 chunk
                spec((C, 1), lambda b, p, h: (0, 0), b2_mode),       # b2
            ],
            out_specs=pl.BlockSpec((1, C, tp), lambda b, p, h: (b, 0, p)),
            scratch_shapes=[pltpu.VMEM((C, tp), jnp.float32)],
        )
        return pl.pallas_call(
            _ffn_kernel,
            out_shape=jax.ShapeDtypeStruct((B, C, P_pad), out_dtype),
            grid_spec=grid_spec,
            compiler_params=pltpu.CompilerParams(
                dimension_semantics=("parallel", "parallel", "arbitrary"),
                vmem_limit_bytes=vmem_limit),
            cost_estimate=cost,
        )(x3, w1_k, b1_k, w2_k, b2_k)

    try:
        out3 = _call(True)
    except Exception:
        # Fallback for Pallas versions that reject single-buffered
        # pipeline_mode; semantics are identical (just more VMEM residency).
        out3 = _call(False)

    if P_pad != P:
        out3 = out3[:, :, :P]
    return out3.reshape(B, C, H, W)


def _weight_norm(v, g):
    # PyTorch weight_norm with dim=0: W[o] = g[o] * v[o] / ||v[o]||_2,
    # norm over all dims except the out-channel axis.
    norm = jnp.sqrt(jnp.sum(v * v, axis=tuple(range(1, v.ndim)), keepdims=True))
    return g.reshape((-1,) + (1,) * (v.ndim - 1)) * v / norm


def reference_ffn_f32(x_nchw, w1, b1, w2, b2):
    """Pure-JAX exact f32 reference (loose sanity check)."""
    B, C, H, W = x_nchw.shape
    x2d = jnp.transpose(x_nchw, (0, 2, 3, 1)).reshape(-1, C).astype(jnp.float32)
    h = x2d @ w1.T + b1
    h = 0.5 * h * (1.0 + lax.erf(h * _INV_SQRT2))
    y = h @ w2.T + b2
    y = y.reshape(B, H, W, C)
    return jnp.transpose(y, (0, 3, 1, 2)).astype(x_nchw.dtype)


def reference_ffn_bf16(x_nchw, w1, b1, w2, b2):
    """Pure-JAX reference with the same mixed-precision recipe as the kernel
    (bf16 matmul operands, f32 accumulation, f32 GELU epilogue)."""
    B, C, H, W = x_nchw.shape
    x3 = x_nchw.reshape(B, C, H * W).astype(jnp.bfloat16)
    h = jnp.einsum("oc,bcp->bop", w1.astype(jnp.bfloat16), x3,
                   preferred_element_type=jnp.float32) + b1[None, :, None]
    h = 0.5 * h * (1.0 + lax.erf(h * _INV_SQRT2))
    y = jnp.einsum("co,bop->bcp", w2.astype(jnp.bfloat16), h.astype(jnp.bfloat16),
                   preferred_element_type=jnp.float32) + b2[None, :, None]
    return y.reshape(B, C, H, W).astype(x_nchw.dtype)


def _run_case(B, dim, Hh, Ww, mult, kseed):
    hidden = dim * mult
    k = jax.random.split(kseed, 7)
    x = jax.random.normal(k[0], (B, dim, Hh, Ww), dtype=jnp.float32)

    # Conv2d(dim, hidden, 1): v1 (hidden, dim, 1, 1), g1 (hidden,), b1 (hidden,)
    v1 = jax.random.normal(k[1], (hidden, dim, 1, 1), dtype=jnp.float32) * 0.1
    g1 = jax.random.uniform(k[2], (hidden,), minval=0.5, maxval=1.5,
                            dtype=jnp.float32)
    b1 = jax.random.normal(k[3], (hidden,), dtype=jnp.float32) * 0.05
    # Conv2d(hidden, dim, 1)
    v2 = jax.random.normal(k[4], (dim, hidden, 1, 1), dtype=jnp.float32) * 0.1
    g2 = jax.random.uniform(k[5], (dim,), minval=0.5, maxval=1.5,
                            dtype=jnp.float32)
    b2 = jax.random.normal(k[6], (dim,), dtype=jnp.float32) * 0.05

    # Resolve weight-norm and squeeze the 1x1 spatial kernel dims (glue).
    w1 = _weight_norm(v1, g1).reshape(hidden, dim)
    w2 = _weight_norm(v2, g2).reshape(dim, hidden)

    out = jax.block_until_ready(feedforward_pallas(x, w1, b1, w2, b2))
    assert out.shape == (B, dim, Hh, Ww)

    # Tight check vs a reference using the identical bf16/f32 recipe.
    ref_bf16 = reference_ffn_bf16(x, w1, b1, w2, b2)
    assert jnp.allclose(out, ref_bf16, atol=5e-3, rtol=5e-3), \
        float(jnp.max(jnp.abs(out - ref_bf16)))

    # Loose sanity check vs the exact-f32 reference (bf16 operands => ~1e-2).
    ref_f32 = reference_ffn_f32(x, w1, b1, w2, b2)
    assert jnp.allclose(out, ref_f32, atol=2e-1, rtol=2e-1), \
        float(jnp.max(jnp.abs(out - ref_f32)))


if __name__ == "__main__":
    key = jax.random.PRNGKey(0)
    k0, k1 = jax.random.split(key)

    # Primary small case implied by the module (B=2, dim=4, 16x16, mult=4).
    _run_case(B=2, dim=4, Hh=16, Ww=16, mult=4, kseed=k0)

    # Exercises hidden-axis chunking (hidden=1024 -> two 512-chunks with the
    # f32 accumulator path) and the ragged pixel pad (81 -> 128 lanes).
    _run_case(B=1, dim=256, Hh=9, Ww=9, mult=4, kseed=k1)

    print("KERNEL_OK")
</pallas_src>

<mosaic_0001>
module attributes {stable_mosaic.version = 11 : i64} {
  func.func @_ffn_kernel(%arg0: i32, %arg1: i32, %arg2: i32, %arg3: memref<1x4x256xf32, #tpu.memory_space<vmem>>, %arg4: memref<16x4xbf16, #tpu.memory_space<vmem>>, %arg5: memref<16x1xf32, #tpu.memory_space<vmem>>, %arg6: memref<4x16xbf16, #tpu.memory_space<vmem>>, %arg7: memref<4x1xf32, #tpu.memory_space<vmem>>, %arg8: memref<1x4x256xf32, #tpu.memory_space<vmem>>, %arg9: memref<4x256xf32, #tpu.memory_space<vmem>>) attributes {dimension_semantics = [#tpu.dimension_semantics<parallel>, #tpu.dimension_semantics<parallel>, #tpu.dimension_semantics<arbitrary>], iteration_bounds = array<i64: 2, 1, 1>, scalar_prefetch = 0 : i64, scratch_operands = 1 : i64, tpu.core_type = #tpu.core_type<tc>, window_params = [{transform_indices = @transform_0, window_bounds = array<i64: 1, 4, 256>}, {pipeline_mode = #tpu.pipeline_mode<synchronous>, transform_indices = @transform_1, window_bounds = array<i64: 16, 4>}, {pipeline_mode = #tpu.pipeline_mode<synchronous>, transform_indices = @transform_2, window_bounds = array<i64: 16, 1>}, {pipeline_mode = #tpu.pipeline_mode<synchronous>, transform_indices = @transform_3, window_bounds = array<i64: 4, 16>}, {pipeline_mode = #tpu.pipeline_mode<synchronous>, transform_indices = @transform_4, window_bounds = array<i64: 4, 1>}, {transform_indices = @transform_5, window_bounds = array<i64: 1, 4, 256>}]} {
    %c0_i32 = arith.constant 0 : i32
    %0 = arith.cmpi eq, %arg2, %c0_i32 : i32
    %1 = arith.extui %0 : i1 to i32
    %c0_i32_0 = arith.constant 0 : i32
    %2 = arith.cmpi ne, %1, %c0_i32_0 : i32
    scf.if %2 {
      %cst_19 = arith.constant 0.000000e+00 : f32
      %28 = vector.broadcast %cst_19 : f32 to vector<4x256xf32>
      %c0_20 = arith.constant 0 : index
      %c0_21 = arith.constant 0 : index
      %29 = vector.load %arg9[%c0_20, %c0_21] : memref<4x256xf32, #tpu.memory_space<vmem>>, vector<4x256xf32>
      tpu.vector_store %arg9[%c0_20, %c0_21], %28 {strides = array<i32>} : memref<4x256xf32, #tpu.memory_space<vmem>>, vector<4x256xf32>,
    } else {
    }
    %c0 = arith.constant 0 : index
    %c0_1 = arith.constant 0 : index
    %c0_2 = arith.constant 0 : index
    %3 = vector.load %arg3[%c0, %c0_1, %c0_2] : memref<1x4x256xf32, #tpu.memory_space<vmem>>, vector<1x4x256xf32>
    %4 = vector.shape_cast %3 : vector<1x4x256xf32> to vector<4x256xf32>
    %5 = arith.truncf %4 : vector<4x256xf32> to vector<4x256xbf16>
    %c0_3 = arith.constant 0 : index
    %c0_4 = arith.constant 0 : index
    %6 = vector.load %arg4[%c0_3, %c0_4] : memref<16x4xbf16, #tpu.memory_space<vmem>>, vector<16x4xbf16>
    %cst = arith.constant dense<0.000000e+00> : vector<16x256xf32>
    %7 = tpu.matmul %6, %5, %cst {dimension_numbers = #tpu.dot_dimension_numbers<[1], [0], [0], [1], [0, 0, 1, 1], [], []>} : vector<16x4xbf16>, vector<4x256xbf16>, vector<16x256xf32> -> vector<16x256xf32>
    %c0_5 = arith.constant 0 : index
    %c0_6 = arith.constant 0 : index
    %8 = vector.load %arg5[%c0_5, %c0_6] : memref<16x1xf32, #tpu.memory_space<vmem>>, vector<16x1xf32>
    %9 = vector.broadcast %8 : vector<16x1xf32> to vector<16x256xf32>
    %10 = arith.addf %7, %9 : vector<16x256xf32>
    %cst_7 = arith.constant 5.000000e-01 : f32
    %11 = vector.broadcast %cst_7 : f32 to vector<16x256xf32>
    %12 = arith.mulf %11, %10 : vector<16x256xf32>
    %cst_8 = arith.constant 0.707106769 : f32
    %13 = vector.broadcast %cst_8 : f32 to vector<16x256xf32>
    %14 = arith.mulf %10, %13 : vector<16x256xf32>
    %15 = math.erf %14 : vector<16x256xf32>
    %cst_9 = arith.constant 1.000000e+00 : f32
    %16 = vector.broadcast %cst_9 : f32 to vector<16x256xf32>
    %17 = arith.addf %16, %15 : vector<16x256xf32>
    %18 = arith.mulf %12, %17 : vector<16x256xf32>
    %c0_10 = arith.constant 0 : index
    %c0_11 = arith.constant 0 : index
    %19 = vector.load %arg9[%c0_10, %c0_11] : memref<4x256xf32, #tpu.memory_space<vmem>>, vector<4x256xf32>
    %c0_12 = arith.constant 0 : index
    %c0_13 = arith.constant 0 : index
    %20 = vector.load %arg6[%c0_12, %c0_13] : memref<4x16xbf16, #tpu.memory_space<vmem>>, vector<4x16xbf16>
    %21 = arith.truncf %18 : vector<16x256xf32> to vector<16x256xbf16>
    %cst_14 = arith.constant dense<0.000000e+00> : vector<4x256xf32>
    %22 = tpu.matmul %20, %21, %cst_14 {dimension_numbers = #tpu.dot_dimension_numbers<[1], [0], [0], [1], [0, 0, 1, 1], [], []>} : vector<4x16xbf16>, vector<16x256xbf16>, vector<4x256xf32> -> vector<4x256xf32>
    %23 = arith.addf %19, %22 : vector<4x256xf32>
    %c0_15 = arith.constant 0 : index
    %c0_16 = arith.constant 0 : index
    %24 = vector.load %arg9[%c0_15, %c0_16] : memref<4x256xf32, #tpu.memory_space<vmem>>, vector<4x256xf32>
    tpu.vector_store %arg9[%c0_15, %c0_16], %23 {strides = array<i32>} : memref<4x256xf32, #tpu.memory_space<vmem>>, vector<4x256xf32>,
    %c0_i32_17 = arith.constant 0 : i32
    %25 = arith.cmpi eq, %arg2, %c0_i32_17 : i32
    %26 = arith.extui %25 : i1 to i32
    %c0_i32_18 = arith.constant 0 : i32
    %27 = arith.cmpi ne, %26, %c0_i32_18 : i32
    scf.if %27 {
      %c0_19 = arith.constant 0 : index
      %c0_20 = arith.constant 0 : index
      %28 = vector.load %arg9[%c0_19, %c0_20] : memref<4x256xf32, #tpu.memory_space<vmem>>, vector<4x256xf32>
      %c0_21 = arith.constant 0 : index
      %c0_22 = arith.constant 0 : index
      %29 = vector.load %arg7[%c0_21, %c0_22] : memref<4x1xf32, #tpu.memory_space<vmem>>, vector<4x1xf32>
      %30 = vector.broadcast %29 : vector<4x1xf32> to vector<4x256xf32>
      %31 = arith.addf %28, %30 : vector<4x256xf32>
      %c0_23 = arith.constant 0 : index
      %c0_24 = arith.constant 0 : index
      %c0_25 = arith.constant 0 : index
      %32 = vector.load %arg8[%c0_23, %c0_24, %c0_25] : memref<1x4x256xf32, #tpu.memory_space<vmem>>, vector<1x4x256xf32>
      %33 = vector.shape_cast %32 : vector<1x4x256xf32> to vector<4x256xf32>
      %34 = vector.shape_cast %31 : vector<4x256xf32> to vector<1x4x256xf32>
      tpu.vector_store %arg8[%c0_23, %c0_24, %c0_25], %34 {strides = array<i32>} : memref<1x4x256xf32, #tpu.memory_space<vmem>>, vector<1x4x256xf32>,
    } else {
    }
    return
  }
  func.func @transform_0(%arg0: i32, %arg1: i32, %arg2: i32) -> (i32, i32, i32) {
    %c0_i32 = arith.constant 0 : i32
    %c0_i32_0 = arith.constant 0 : i32
    return %arg0, %c0_i32, %arg1 : i32, i32, i32
  }
  func.func @transform_1(%arg0: i32, %arg1: i32, %arg2: i32) -> (i32, i32) {
    %c0_i32 = arith.constant 0 : i32
    %c0_i32_0 = arith.constant 0 : i32
    return %arg2, %c0_i32 : i32, i32
  }
  func.func @transform_2(%arg0: i32, %arg1: i32, %arg2: i32) -> (i32, i32) {
    %c0_i32 = arith.constant 0 : i32
    %c0_i32_0 = arith.constant 0 : i32
    return %arg2, %c0_i32 : i32, i32
  }
  func.func @transform_3(%arg0: i32, %arg1: i32, %arg2: i32) -> (i32, i32) {
    %c0_i32 = arith.constant 0 : i32
    %c0_i32_0 = arith.constant 0 : i32
    return %c0_i32, %arg2 : i32, i32
  }
  func.func @transform_4(%arg0: i32, %arg1: i32, %arg2: i32) -> (i32, i32) {
    %c0_i32 = arith.constant 0 : i32
    %c0_i32_0 = arith.constant 0 : i32
    %c0_i32_1 = arith.constant 0 : i32
    return %c0_i32, %c0_i32_0 : i32, i32
  }
  func.func @transform_5(%arg0: i32, %arg1: i32, %arg2: i32) -> (i32, i32, i32) {
    %c0_i32 = arith.constant 0 : i32
    %c0_i32_0 = arith.constant 0 : i32
    return %arg0, %c0_i32, %arg1 : i32, i32, i32
  }
}

module attributes {stable_mosaic.version = 11 : i64} {
  func.func @_ffn_kernel(%arg0: i32, %arg1: i32, %arg2: i32, %arg3: memref<1x4x256xf32, #tpu.memory_space<vmem>>, %arg4: memref<16x4xbf16, #tpu.memory_space<vmem>>, %arg5: memref<16x1xf32, #tpu.memory_space<vmem>>, %arg6: memref<4x16xbf16, #tpu.memory_space<vmem>>, %arg7: memref<4x1xf32, #tpu.memory_space<vmem>>, %arg8: memref<1x4x256xf32, #tpu.memory_space<vmem>>, %arg9: memref<4x256xf32, #tpu.memory_space<vmem>>) attributes {dimension_semantics = [#tpu.dimension_semantics<parallel>, #tpu.dimension_semantics<parallel>, #tpu.dimension_semantics<arbitrary>], iteration_bounds = array<i64: 2, 1, 1>, scalar_prefetch = 0 : i64, scratch_operands = 1 : i64, tpu.core_type = #tpu.core_type<tc>, window_params = [{transform_indices = @transform_0, window_bounds = array<i64: 1, 4, 256>}, {transform_indices = @transform_1, window_bounds = array<i64: 16, 4>}, {transform_indices = @transform_2, window_bounds = array<i64: 16, 1>}, {transform_indices = @transform_3, window_bounds = array<i64: 4, 16>}, {pipeline_mode = #tpu.pipeline_mode<synchronous>, transform_indices = @transform_4, window_bounds = array<i64: 4, 1>}, {transform_indices = @transform_5, window_bounds = array<i64: 1, 4, 256>}]} {
    %c0_i32 = arith.constant 0 : i32
    %0 = arith.cmpi eq, %arg2, %c0_i32 : i32
    %1 = arith.extui %0 : i1 to i32
    %c0_i32_0 = arith.constant 0 : i32
    %2 = arith.cmpi ne, %1, %c0_i32_0 : i32
    scf.if %2 {
      %cst_19 = arith.constant 0.000000e+00 : f32
      %28 = vector.broadcast %cst_19 : f32 to vector<4x256xf32>
      %c0_20 = arith.constant 0 : index
      %c0_21 = arith.constant 0 : index
      %29 = vector.load %arg9[%c0_20, %c0_21] : memref<4x256xf32, #tpu.memory_space<vmem>>, vector<4x256xf32>
      tpu.vector_store %arg9[%c0_20, %c0_21], %28 {strides = array<i32>} : memref<4x256xf32, #tpu.memory_space<vmem>>, vector<4x256xf32>,
    } else {
    }
    %c0 = arith.constant 0 : index
    %c0_1 = arith.constant 0 : index
    %c0_2 = arith.constant 0 : index
    %3 = vector.load %arg3[%c0, %c0_1, %c0_2] : memref<1x4x256xf32, #tpu.memory_space<vmem>>, vector<1x4x256xf32>
    %4 = vector.shape_cast %3 : vector<1x4x256xf32> to vector<4x256xf32>
    %5 = arith.truncf %4 : vector<4x256xf32> to vector<4x256xbf16>
    %c0_3 = arith.constant 0 : index
    %c0_4 = arith.constant 0 : index
    %6 = vector.load %arg4[%c0_3, %c0_4] : memref<16x4xbf16, #tpu.memory_space<vmem>>, vector<16x4xbf16>
    %cst = arith.constant dense<0.000000e+00> : vector<16x256xf32>
    %7 = tpu.matmul %6, %5, %cst {dimension_numbers = #tpu.dot_dimension_numbers<[1], [0], [0], [1], [0, 0, 1, 1], [], []>} : vector<16x4xbf16>, vector<4x256xbf16>, vector<16x256xf32> -> vector<16x256xf32>
    %c0_5 = arith.constant 0 : index
    %c0_6 = arith.constant 0 : index
    %8 = vector.load %arg5[%c0_5, %c0_6] : memref<16x1xf32, #tpu.memory_space<vmem>>, vector<16x1xf32>
    %9 = vector.broadcast %8 : vector<16x1xf32> to vector<16x256xf32>
    %10 = arith.addf %7, %9 : vector<16x256xf32>
    %cst_7 = arith.constant 5.000000e-01 : f32
    %11 = vector.broadcast %cst_7 : f32 to vector<16x256xf32>
    %12 = arith.mulf %11, %10 : vector<16x256xf32>
    %cst_8 = arith.constant 0.707106769 : f32
    %13 = vector.broadcast %cst_8 : f32 to vector<16x256xf32>
    %14 = arith.mulf %10, %13 : vector<16x256xf32>
    %15 = math.erf %14 : vector<16x256xf32>
    %cst_9 = arith.constant 1.000000e+00 : f32
    %16 = vector.broadcast %cst_9 : f32 to vector<16x256xf32>
    %17 = arith.addf %16, %15 : vector<16x256xf32>
    %18 = arith.mulf %12, %17 : vector<16x256xf32>
    %c0_10 = arith.constant 0 : index
    %c0_11 = arith.constant 0 : index
    %19 = vector.load %arg9[%c0_10, %c0_11] : memref<4x256xf32, #tpu.memory_space<vmem>>, vector<4x256xf32>
    %c0_12 = arith.constant 0 : index
    %c0_13 = arith.constant 0 : index
    %20 = vector.load %arg6[%c0_12, %c0_13] : memref<4x16xbf16, #tpu.memory_space<vmem>>, vector<4x16xbf16>
    %21 = arith.truncf %18 : vector<16x256xf32> to vector<16x256xbf16>
    %cst_14 = arith.constant dense<0.000000e+00> : vector<4x256xf32>
    %22 = tpu.matmul %20, %21, %cst_14 {dimension_numbers = #tpu.dot_dimension_numbers<[1], [0], [0], [1], [0, 0, 1, 1], [], []>} : vector<4x16xbf16>, vector<16x256xbf16>, vector<4x256xf32> -> vector<4x256xf32>
    %23 = arith.addf %19, %22 : vector<4x256xf32>
    %c0_15 = arith.constant 0 : index
    %c0_16 = arith.constant 0 : index
    %24 = vector.load %arg9[%c0_15, %c0_16] : memref<4x256xf32, #tpu.memory_space<vmem>>, vector<4x256xf32>
    tpu.vector_store %arg9[%c0_15, %c0_16], %23 {strides = array<i32>} : memref<4x256xf32, #tpu.memory_space<vmem>>, vector<4x256xf32>,
    %c0_i32_17 = arith.constant 0 : i32
    %25 = arith.cmpi eq, %arg2, %c0_i32_17 : i32
    %26 = arith.extui %25 : i1 to i32
    %c0_i32_18 = arith.constant 0 : i32
    %27 = arith.cmpi ne, %26, %c0_i32_18 : i32
    scf.if %27 {
      %c0_19 = arith.constant 0 : index
      %c0_20 = arith.constant 0 : index
      %28 = vector.load %arg9[%c0_19, %c0_20] : memref<4x256xf32, #tpu.memory_space<vmem>>, vector<4x256xf32>
      %c0_21 = arith.constant 0 : index
      %c0_22 = arith.constant 0 : index
      %29 = vector.load %arg7[%c0_21, %c0_22] : memref<4x1xf32, #tpu.memory_space<vmem>>, vector<4x1xf32>
      %30 = vector.broadcast %29 : vector<4x1xf32> to vector<4x256xf32>
      %31 = arith.addf %28, %30 : vector<4x256xf32>
      %c0_23 = arith.constant 0 : index
      %c0_24 = arith.constant 0 : index
      %c0_25 = arith.constant 0 : index
      %32 = vector.load %arg8[%c0_23, %c0_24, %c0_25] : memref<1x4x256xf32, #tpu.memory_space<vmem>>, vector<1x4x256xf32>
      %33 = vector.shape_cast %32 : vector<1x4x256xf32> to vector<4x256xf32>
      %34 = vector.shape_cast %31 : vector<4x256xf32> to vector<1x4x256xf32>
      tpu.vector_store %arg8[%c0_23, %c0_24, %c0_25], %34 {strides = array<i32>} : memref<1x4x256xf32, #tpu.memory_space<vmem>>, vector<1x4x256xf32>,
    } else {
    }
    return
  }
  func.func @transform_0(%arg0: i32, %arg1: i32, %arg2: i32) -> (i32, i32, i32) {
    %c0_i32 = arith.constant 0 : i32
    %c0_i32_0 = arith.constant 0 : i32
    return %arg0, %c0_i32, %arg1 : i32, i32, i32
  }
  func.func @transform_1(%arg0: i32, %arg1: i32, %arg2: i32) -> (i32, i32) {
    %c0_i32 = arith.constant 0 : i32
    %c0_i32_0 = arith.constant 0 : i32
    return %arg2, %c0_i32 : i32, i32
  }
  func.func @transform_2(%arg0: i32, %arg1: i32, %arg2: i32) -> (i32, i32) {
    %c0_i32 = arith.constant 0 : i32
    %c0_i32_0 = arith.constant 0 : i32
    return %arg2, %c0_i32 : i32, i32
  }
  func.func @transform_3(%arg0: i32, %arg1: i32, %arg2: i32) -> (i32, i32) {
    %c0_i32 = arith.constant 0 : i32
    %c0_i32_0 = arith.constant 0 : i32
    return %c0_i32, %arg2 : i32, i32
  }
  func.func @transform_4(%arg0: i32, %arg1: i32, %arg2: i32) -> (i32, i32) {
    %c0_i32 = arith.constant 0 : i32
    %c0_i32_0 = arith.constant 0 : i32
    %c0_i32_1 = arith.constant 0 : i32
    return %c0_i32, %c0_i32_0 : i32, i32
  }
  func.func @transform_5(%arg0: i32, %arg1: i32, %arg2: i32) -> (i32, i32, i32) {
    %c0_i32 = arith.constant 0 : i32
    %c0_i32_0 = arith.constant 0 : i32
    return %arg0, %c0_i32, %arg1 : i32, i32, i32
  }
}

</mosaic_0001>

<llo_original>
// kernel: tpu_custom_call.1
$region0: #{tpu_custom_call.1}
  #allocation0 [shape = 'u32[]', space=smem, size = 0x4, offset = 0x4, fixed_abs, tag = 'smem constant byte address 0x4 - core index']
  #allocation1 [shape = 'u32[72,128]{1,0:T(1,128)}', space=vmem, size = 0x9000, scoped, tag = 'internal scratch']
  #allocation2 [shape = 'f32[4,256]{1,0:T(4,128)}', space=vmem, size = 0x1000, scoped, tag = 'scratch operand']
  %s0 = inlined_call_operand.vmem [shape: f32[2,4,256], index: 0, kind: input, shape index: {}]
  %s1 = inlined_call_operand.vmem [shape: bf16[16,4], index: 1, kind: input, shape index: {}]
  %s2 = inlined_call_operand.vmem [shape: f32[16,1], index: 2, kind: input, shape index: {}]
  %s3 = inlined_call_operand.vmem [shape: bf16[4,16], index: 3, kind: input, shape index: {}]
  %s4 = inlined_call_operand.vmem [shape: f32[4,1], index: 4, kind: input, shape index: {}]
  %s5 = inlined_call_operand.hbm [shape: f32[2,4,256], index: 5, kind: output, shape index: {}]
  %s6 = sld [smem:[#allocation0]]
  $region61: #{tpu_custom_call.1} parent=0
    _
  %s8 = ssub.s32 1, %s6
  %s9 = scalar_select 0, %s8, %s6
  $region1: #{tpu_custom_call.1} parent=0
    #allocation3 [shape = 'u8[8192]{0}', space=vmem, size = 0x2000, scoped, tag = 'output window, operand 0']
    #allocation4 [shape = 's32[2]{0}', space=sflag, size = 0x8, scoped, tag = 'scoped memory for tpu_custom_call.1']
    %10 = vsyncpa [#allocation4], 0
    %s11 = scalar_lea.sflag [#allocation4], 1
    %12 = vsyncpa %s11, 0
    loop: start=0, step=1, limit=4
    $region2: #{tpu_custom_call.1} parent=1 // loop_pre_header
      _
    $region3: #{tpu_custom_call.1} parent=1 // loop_header
      %s14 = sphi 0, %s18
      %p15 = scmp.ge.s32.totalorder %s14, 4
      %s21 = sphi 0, %s40
      %s22 = sphi 0, %s36
      %s23 = sphi 0, %s32
      %s24 = sphi 0, %s21
      %s25 = sphi 0, %s22
      %s26 = sphi 0, %s23
      %s27 = sphi 0, %s24
      %s28 = sphi 0, %s25
      %s29 = sphi 0, %s26
      %s45 = sphi 0, %s47
      %s48 = sphi 0, %s45
      %s49 = sphi 0, %s48
      %s65 = sphi 0, %s49
      %s71 = sphi 0, %s73
      %s74 = sphi 0, %s71
      %s75 = sphi 0, %s74
      %s91 = sphi 0, %s75
      %s97 = sphi 0, %s99
      %s100 = sphi 0, %s97
      %s101 = sphi 0, %s100
      %s117 = sphi 0, %s101
      %s123 = sphi 0, %s125
      %s126 = sphi 0, %s123
      %s127 = sphi 0, %s126
      %s143 = sphi 0, %s127
      %s147 = sphi 0, %s147
      %s149 = sphi 0, %s147
      %s150 = sphi 0, %s149
      %s164 = sphi 0, %s150
      %s172 = sphi 0, %s174
      %s175 = sphi 0, %s172
      %s176 = sphi 0, %s175
      %s192 = sphi 0, %s176
    $region4: #{tpu_custom_call.1} parent=1 // loop_header_branch
      %17 = sbr.rel (%p15) target = $region8
    $region5: #{tpu_custom_call.1} parent=1 // loop_body
      %s19 = ssub.s32 %s14, 1
      %s20 = ssub.s32 %s14, 2
      %s30 = sadd.s32 1, %s23
      %p31 = scmp.ge.s32.totalorder %s30, 1
      %s32 = scalar_select %p31, 0, %s30
      %s33 = sadd.s32 1, %s22
      %s34 = scalar_select %p31, %s33, %s22
      %p35 = scmp.ge.s32.totalorder %s34, 1
      %s36 = scalar_select %p35, 0, %s34
      %s37 = sadd.s32 1, %s21
      %s38 = scalar_select %p35, %s37, %s21
      %p39 = scmp.ge.s32.totalorder %s38, 2
      %s40 = scalar_select %p39, 0, %s38
      %s41 = ssub.s32 %s21, %s40
      %s42 = ssub.s32 %s22, %s36
      %s43 = sor.u32 %s41, %s42
      %p44 = scmp.eq.s32.totalorder %s43, 0
      %s46 = sadd.s32 %s45, 1
      %s47 = scalar_select %p44, %s45, %s46
      %p50 = pneg %p44
      %p51 = scmp.eq.s32.totalorder %s14, 1
      %p52 = por %p50, %p51
      %p53 = scmp.ne.s32.totalorder %s45, %s48
      %p54 = scmp.eq.s32.totalorder %s14, 0
      %p55 = por %p53, %p54
      %p56 = scmp.ne.s32.totalorder %s45, %s48
      %p57 = scmp.eq.s32.totalorder %s19, 1
      %p58 = por %p56, %p57
      %p59 = scmp.ne.s32.totalorder %s48, %s49
      %p60 = scmp.eq.s32.totalorder %s19, 0
      %p61 = por %p59, %p60
      %p62 = scmp.ne.s32.totalorder %s48, %s49
      %p63 = scmp.eq.s32.totalorder %s20, 1
      %p64 = por %p62, %p63
      %p66 = scmp.ne.s32.totalorder %s49, %s65
      %p67 = scmp.eq.s32.totalorder %s20, 0
      %p68 = por %p66, %p67
      %s69 = ssub.s32 %s23, %s32
      %p70 = scmp.eq.s32.totalorder %s69, 0
      %s72 = sadd.s32 %s71, 1
      %s73 = scalar_select %p70, %s71, %s72
      %p76 = pneg %p70
      %p77 = scmp.eq.s32.totalorder %s14, 1
      %p78 = por %p76, %p77
      %p79 = scmp.ne.s32.totalorder %s71, %s74
      %p80 = scmp.eq.s32.totalorder %s14, 0
      %p81 = por %p79, %p80
      %p82 = scmp.ne.s32.totalorder %s71, %s74
      %p83 = scmp.eq.s32.totalorder %s19, 1
      %p84 = por %p82, %p83
      %p85 = scmp.ne.s32.totalorder %s74, %s75
      %p86 = scmp.eq.s32.totalorder %s19, 0
      %p87 = por %p85, %p86
      %p88 = scmp.ne.s32.totalorder %s74, %s75
      %p89 = scmp.eq.s32.totalorder %s20, 1
      %p90 = por %p88, %p89
      %p92 = scmp.ne.s32.totalorder %s75, %s91
      %p93 = scmp.eq.s32.totalorder %s20, 0
      %p94 = por %p92, %p93
      %s95 = ssub.s32 %s23, %s32
      %p96 = scmp.eq.s32.totalorder %s95, 0
      %s98 = sadd.s32 %s97, 1
      %s99 = scalar_select %p96, %s97, %s98
      %p102 = pneg %p96
      %p103 = scmp.eq.s32.totalorder %s14, 1
      %p104 = por %p102, %p103
      %p105 = scmp.ne.s32.totalorder %s97, %s100
      %p106 = scmp.eq.s32.totalorder %s14, 0
      %p107 = por %p105, %p106
      %p108 = scmp.ne.s32.totalorder %s97, %s100
      %p109 = scmp.eq.s32.totalorder %s19, 1
      %p110 = por %p108, %p109
      %p111 = scmp.ne.s32.totalorder %s100, %s101
      %p112 = scmp.eq.s32.totalorder %s19, 0
      %p113 = por %p111, %p112
      %p114 = scmp.ne.s32.totalorder %s100, %s101
      %p115 = scmp.eq.s32.totalorder %s20, 1
      %p116 = por %p114, %p115
      %p118 = scmp.ne.s32.totalorder %s101, %s117
      %p119 = scmp.eq.s32.totalorder %s20, 0
      %p120 = por %p118, %p119
      %s121 = ssub.s32 %s23, %s32
      %p122 = scmp.eq.s32.totalorder %s121, 0
      %s124 = sadd.s32 %s123, 1
      %s125 = scalar_select %p122, %s123, %s124
      %p128 = pneg %p122
      %p129 = scmp.eq.s32.totalorder %s14, 1
      %p130 = por %p128, %p129
      %p131 = scmp.ne.s32.totalorder %s123, %s126
      %p132 = scmp.eq.s32.totalorder %s14, 0
      %p133 = por %p131, %p132
      %p134 = scmp.ne.s32.totalorder %s123, %s126
      %p135 = scmp.eq.s32.totalorder %s19, 1
      %p136 = por %p134, %p135
      %p137 = scmp.ne.s32.totalorder %s126, %s127
      %p138 = scmp.eq.s32.totalorder %s19, 0
      %p139 = por %p137, %p138
      %p140 = scmp.ne.s32.totalorder %s126, %s127
      %p141 = scmp.eq.s32.totalorder %s20, 1
      %p142 = por %p140, %p141
      %p144 = scmp.ne.s32.totalorder %s127, %s143
      %p145 = scmp.eq.s32.totalorder %s20, 0
      %p146 = por %p144, %p145
      %s148 = sadd.s32 %s147, 1
      %p151 = scmp.eq.s32.totalorder %s14, 1
      %p152 = scmp.ne.s32.totalorder %s147, %s149
      %p153 = scmp.eq.s32.totalorder %s14, 0
      %p154 = por %p152, %p153
      %p155 = scmp.ne.s32.totalorder %s147, %s149
      %p156 = scmp.eq.s32.totalorder %s19, 1
      %p157 = por %p155, %p156
      %p158 = scmp.ne.s32.totalorder %s149, %s150
      %p159 = scmp.eq.s32.totalorder %s19, 0
      %p160 = por %p158, %p159
      %p161 = scmp.ne.s32.totalorder %s149, %s150
      %p162 = scmp.eq.s32.totalorder %s20, 1
      %p163 = por %p161, %p162
      %p165 = scmp.ne.s32.totalorder %s150, %s164
      %p166 = scmp.eq.s32.totalorder %s20, 0
      %p167 = por %p165, %p166
      %s168 = ssub.s32 %s21, %s40
      %s169 = ssub.s32 %s22, %s36
      %s170 = sor.u32 %s168, %s169
      %p171 = scmp.eq.s32.totalorder %s170, 0
      %s173 = sadd.s32 %s172, 1
      %s174 = scalar_select %p171, %s172, %s173
      %p177 = pneg %p171
      %p178 = scmp.eq.s32.totalorder %s14, 1
      %p179 = por %p177, %p178
      %p180 = scmp.ne.s32.totalorder %s172, %s175
      %p181 = scmp.eq.s32.totalorder %s14, 0
      %p182 = por %p180, %p181
      %p183 = scmp.ne.s32.totalorder %s172, %s175
      %p184 = scmp.eq.s32.totalorder %s19, 1
      %p185 = por %p183, %p184
      %p186 = scmp.ne.s32.totalorder %s175, %s176
      %p187 = scmp.eq.s32.totalorder %s19, 0
      %p188 = por %p186, %p187
      %p189 = scmp.ne.s32.totalorder %s175, %s176
      %p190 = scmp.eq.s32.totalorder %s20, 1
      %p191 = por %p189, %p190
      %p193 = scmp.ne.s32.totalorder %s176, %s192
      %p194 = scmp.eq.s32.totalorder %s20, 0
      %p195 = por %p193, %p194
      %p196 = scmp.le.s32.totalorder 1, %s14
      %p197 = scmp.lt.s32.totalorder %s14, 3
      %p198 = pnand %p196, %p197
      %p199 = pneg %p198
      // Predicated region
      $region9: #{tpu_custom_call.1} parent=5 // pred_check
        _
      $region10: #{tpu_custom_call.1} parent=5 // pred_check_branch
        %201 = sbr.rel (%p198) target = $region12
      $region11: #{tpu_custom_call.1} parent=5 // pred_region
        %s202 = ssub.s32 %s14, 1
        // Predicated region
        $region13: #{tpu_custom_call.1} parent=11 // pred_check
          %p203 = pneg %p87
        $region14: #{tpu_custom_call.1} parent=11 // pred_check_branch
          %205 = sbr.rel (%p203) target = $region16
        $region15: #{tpu_custom_call.1} parent=11 // pred_region
          %s206 = smul.u32 2, %s26
          %p207 = scmp.lt.s32.totalorder %s206, 1
          %s208 = scalar_select %p207, %s206, 1
          %s209 = smul.addr %s208, 4
          %s210 = scalar_lea.vmem %s1, %s209
          %s211 = smul.u32 2, %s26
        $region16: #{tpu_custom_call.1} parent=11 // pred_fallthru
          _
        // Predicated region
        $region17: #{tpu_custom_call.1} parent=11 // pred_check
          %p212 = pneg %p113
        $region18: #{tpu_custom_call.1} parent=11 // pred_check_branch
          %214 = sbr.rel (%p212) target = $region20
        $region19: #{tpu_custom_call.1} parent=11 // pred_region
          %s215 = smul.u32 2, %s26
          %p216 = scmp.lt.s32.totalorder %s215, 1
          %s217 = scalar_select %p216, %s215, 1
          %s218 = smul.addr %s217, 8
          %s219 = scalar_lea.vmem %s2, %s218
          %s220 = smul.u32 2, %s26
        $region20: #{tpu_custom_call.1} parent=11 // pred_fallthru
          _
        // Predicated region
        $region21: #{tpu_custom_call.1} parent=11 // pred_check
          %p221 = pneg %p139
        $region22: #{tpu_custom_call.1} parent=11 // pred_check_branch
          %223 = sbr.rel (%p221) target = $region24
        $region23: #{tpu_custom_call.1} parent=11 // pred_region
          %p224 = scmp.lt.s32.totalorder %s26, 0
          %s225 = scalar_select %p224, %s26, 0
          %s226 = smul.addr %s225, 2
          %s227 = scalar_lea.vmem %s3, %s226
        $region24: #{tpu_custom_call.1} parent=11 // pred_fallthru
          _
        // Predicated region
        $region25: #{tpu_custom_call.1} parent=11 // pred_check
          %p228 = pneg %p160
        $region26: #{tpu_custom_call.1} parent=11 // pred_check_branch
          %230 = sbr.rel (%p228) target = $region28
        $region27: #{tpu_custom_call.1} parent=11 // pred_region
          _
        $region28: #{tpu_custom_call.1} parent=11 // pred_fallthru
          _
      $region12: #{tpu_custom_call.1} parent=5 // pred_fallthru
        _
      %p231 = scmp.lt.s32.totalorder %s14, 2
      // Predicated region
      $region29: #{tpu_custom_call.1} parent=5 // pred_check
        %p232 = pneg %p231
      $region30: #{tpu_custom_call.1} parent=5 // pred_check_branch
        %234 = sbr.rel (%p232) target = $region32
      $region31: #{tpu_custom_call.1} parent=5 // pred_region
        // Predicated region
        $region33: #{tpu_custom_call.1} parent=31 // pred_check
          %p235 = pneg %p55
        $region34: #{tpu_custom_call.1} parent=31 // pred_check_branch
          %237 = sbr.rel (%p235) target = $region36
        $region35: #{tpu_custom_call.1} parent=31 // pred_region
          %s238 = smul.u32 2, %s22
          %p239 = scmp.lt.s32.totalorder %s21, 1
          %s240 = scalar_select %p239, %s21, 1
          %p241 = scmp.lt.s32.totalorder %s238, 1
          %s242 = scalar_select %p241, %s238, 1
          %s243 = smul.addr %s240, 2
          %s244 = sadd.s32 %s242, %s243
          %s245 = smul.addr %s244, 4
          %s246 = scalar_lea.vmem %s0, %s245
          %s247 = smul.u32 2, %s22
        $region36: #{tpu_custom_call.1} parent=31 // pred_fallthru
          _
      $region32: #{tpu_custom_call.1} parent=5 // pred_fallthru
        _
      %p248 = scmp.le.s32.totalorder 1, %s14
      %p249 = scmp.lt.s32.totalorder %s14, 3
      %p250 = pnand %p248, %p249
      %p251 = pneg %p250
      // Predicated region
      $region37: #{tpu_custom_call.1} parent=5 // pred_check
        _
      $region38: #{tpu_custom_call.1} parent=5 // pred_check_branch
        %253 = sbr.rel (%p250) target = $region40
      $region39: #{tpu_custom_call.1} parent=5 // pred_region
        %s254 = ssub.s32 %s14, 1
        %s255 = smul.u32 2, %s25
        %p256 = scmp.lt.s32.totalorder %s24, 1
        %s257 = scalar_select %p256, %s24, 1
        %p258 = scmp.lt.s32.totalorder %s255, 1
        %s259 = scalar_select %p258, %s255, 1
        %s260 = smul.addr %s257, 2
        %s261 = sadd.s32 %s259, %s260
        %s262 = smul.addr %s261, 4
        %s263 = scalar_lea.vmem %s0, %s262
        %p264 = pneg %p61
        %p265 = pneg %p58
        %s266 = smul.u32 2, %s26
        %p267 = scmp.lt.s32.totalorder %s266, 1
        %s268 = scalar_select %p267, %s266, 1
        %s269 = smul.addr %s268, 4
        %s270 = scalar_lea.vmem %s1, %s269
        %p271 = pneg %p87
        %p272 = pneg %p84
        %s273 = smul.u32 2, %s26
        %p274 = scmp.lt.s32.totalorder %s273, 1
        %s275 = scalar_select %p274, %s273, 1
        %s276 = smul.addr %s275, 8
        %s277 = scalar_lea.vmem %s2, %s276
        %p278 = pneg %p113
        %p279 = pneg %p110
        %p280 = scmp.lt.s32.totalorder %s26, 0
        %s281 = scalar_select %p280, %s26, 0
        %s282 = smul.addr %s281, 2
        %s283 = scalar_lea.vmem %s3, %s282
        %p284 = pneg %p139
        %p285 = pneg %p136
        %p286 = pneg %p160
        %p287 = pneg %p157
        %p288 = pneg %p188
        %p289 = pneg %p185
        %s290 = sand.u32 %s175, 1
        %s291 = scalar_lea.sflag [#allocation4], %s290
        %s292 = sand.u32 %s175, 1
        %s293 = smul.addr %s292, 8
        %s294 = scalar_lea.vmem [#allocation3], %s293
        %s295 = smul.u32 2, %s25
        %p296 = scmp.lt.s32.totalorder %s24, 1
        %s297 = scalar_select %p296, %s24, 1
        %p298 = scmp.lt.s32.totalorder %s295, 1
        %s299 = scalar_select %p298, %s295, 1
        %s300 = smul.addr %s297, 2
        %s301 = sadd.s32 %s299, %s300
        %s302 = smul.addr %s301, 4
        %s303 = scalar_lea.vmem %s0, %s302
        %s304 = smul.u32 2, %s25
        %s305 = smul.u32 2, %s26
        %p306 = scmp.lt.s32.totalorder %s305, 1
        %s307 = scalar_select %p306, %s305, 1
        %s308 = smul.addr %s307, 4
        %s309 = scalar_lea.vmem %s1, %s308
        %s310 = smul.u32 2, %s26
        %s311 = smul.u32 2, %s26
        %p312 = scmp.lt.s32.totalorder %s311, 1
        %s313 = scalar_select %p312, %s311, 1
        %s314 = smul.addr %s313, 8
        %s315 = scalar_lea.vmem %s2, %s314
        %s316 = smul.u32 2, %s26
        %p317 = scmp.lt.s32.totalorder %s26, 0
        %s318 = scalar_select %p317, %s26, 0
        %s319 = smul.addr %s318, 2
        %s320 = scalar_lea.vmem %s3, %s319
        %s321 = smul.u32 2, %s25
        %p323 = scmp.eq.s32.totalorder %s26, 0
        // Predicated region
        $region41: #{tpu_custom_call.1} parent=39 // pred_check
          %p324 = pneg %p323
        $region42: #{tpu_custom_call.1} parent=39 // pred_check_branch
          %326 = sbr.rel (%p324) target = $region44
        $region43: #{tpu_custom_call.1} parent=39 // pred_region
          %327 = vst [vmem:[#allocation2] sm:$0xff] 0.0
        $region44: #{tpu_custom_call.1} parent=39 // pred_fallthru
          _
        %v328 = vld [vmem:[%s303] sm:$0xff]
        %330 = vst [vmem:[#allocation1] ss:$2 sm:$0xff] %v328
        %v331 = vld.sshfl [vmem:[#allocation1] sm:$0xff pattern:$0x75316420]
        %v332 = vld.sshfl [vmem:[#allocation1 + $0x8] sm:$0xff pattern:$0x75316420]
        %v335 = vpack.c.bf16 %v331, %v331
        %v336 = vpack.c.bf16 %v332, %v332
        %v337 = vld [vmem:[%s309] sm:$0xf]
        %v338 = vld [vmem:[%s309 + $0x4] sm:$0xf]
        %v339 = vld [vmem:[%s315] sm:$0xff]
        %v340 = vld [vmem:[%s315 + $0x8] sm:$0xff]
        %342 = vset.pattern.permute.xlu0 0
        %343 = vperm.xlu0 %342, %v339
        %v344 = vpop.permute.xlu0 %343
        %347 = vset.pattern.permute.xlu0 0
        %348 = vperm.xlu0 %347, %v340
        %v349 = vpop.permute.xlu0 %348
        %v353 = vunpack.c.l.b16 %v337
        %v354 = vunpack.c.l.b16 %v338
        %v355 = vpack.c.b16 %v354, %v353
        %vm356 = vcmask 31744
        %v358 = vsel %vm356, %v355, 0
        %vm360 = vcmask 1041408
        %v362 = vsel %vm360, %v335, 0
        %v365 = vsel %vm360, %v336, 0
        %367 = vmatpush.bf16.msra.mxu0 0
        %368 = vmatpush.bf16.msra.mxu0 0
        %369 = vmatpush.bf16.msra.mxu0 0
        %370 = vmatpush.bf16.msra.mxu0 0
        %371 = vmatpush.bf16.msra.mxu0 0
        %372 = vmatpush.bf16.msra.mxu0 0
        %373 = vmatpush.bf16.msra.mxu0 0
        %374 = vmatpush.bf16.msra.mxu0 %v362
        %375 = vmatmul.bf16.gmra.mxu0 %v358
        %v376 = vpop.f32.mrf.mxu0
        %v377 = vadd.f32 %v344, %v376
        %v378 = vpop.f32.mrf.mxu0
        %v379 = vadd.f32 %v349, %v378
        %380 = vdwg.mxu0
        %381 = vmatpush.bf16.msra.mxu0 0
        %382 = vmatpush.bf16.msra.mxu0 0
        %383 = vmatpush.bf16.msra.mxu0 0
        %384 = vmatpush.bf16.msra.mxu0 0
        %385 = vmatpush.bf16.msra.mxu0 0
        %386 = vmatpush.bf16.msra.mxu0 0
        %387 = vmatpush.bf16.msra.mxu0 0
        %388 = vmatpush.bf16.msra.mxu0 %v365
        %389 = vmatmul.bf16.gmra.mxu0 %v358
        %v390 = vpop.f32.mrf.mxu0
        %v391 = vadd.f32 %v344, %v390
        %v392 = vpop.f32.mrf.mxu0
        %v393 = vadd.f32 %v349, %v392
        %394 = vdwg.mxu0
        %v395 = vmul.f32 %v377, 0.5
        %v396 = vmul.f32 %v391, 0.5
        %v397 = vmul.f32 %v379, 0.5
        %v398 = vmul.f32 %v393, 0.5
        %v399 = vmul.f32 %v377, 0.70710677
        %v400 = vmul.f32 %v391, 0.70710677
        %v401 = vmul.f32 %v379, 0.70710677
        %v402 = vmul.f32 %v393, 0.70710677
        %v403 = vmul.f32 %v399, %v399
        %v404 = vmin.f32 16.0, %v403
        %v405 = vmul.f32 %v404, 2.1237322e-06
        %v406 = vadd.f32 %v405, 0.00028619796
        %v407 = vmul.f32 %v404, %v406
        %v408 = vadd.f32 %v407, 0.0036580483
        %v409 = vmul.f32 %v404, %v408
        %v410 = vadd.f32 %v409, 0.05243302
        %v411 = vmul.f32 %v404, %v410
        %v412 = vadd.f32 %v411, 0.18741608
        %v413 = vmul.f32 %v404, %v412
        %v414 = vadd.f32 %v413, 1.1283791
        %v415 = vmul.f32 %v399, %v414
        %v416 = vmul.f32 %v404, 3.8918573e-05
        %v417 = vadd.f32 %v416, 0.001143296
        %v418 = vmul.f32 %v404, %v417
        %v419 = vadd.f32 %v418, 0.014752088
        %v420 = vmul.f32 %v404, %v419
        %v421 = vadd.f32 %v420, 0.112945676
        %v422 = vmul.f32 %v404, %v421
        %v423 = vadd.f32 %v422, 0.4994258
        %v424 = vmul.f32 %v404, %v423
        %v425 = vadd.f32 %v424, 1.0
        %v426 = vrcp.pop %v425
        %v427 = vmul.f32 %v425, %v426
        %v428 = vsub.f32 1.0, %v427
        %v429 = vmul.f32 %v426, %v428
        %v430 = vadd.f32 %v426, %v429
        %vm431 = vweird.f32 %v425
        %vm432 = vweird.f32 %v426
        %vm433 = vmor %vm431, %vm432
        %v434 = vsel %vm433, %v426, %v430
        %v435 = vand.u32 2147483647, %v425
        %vm436 = vcmp.eq.f32.partialorder %v435, 8.507059e+37
        %v437 = vand.u32 %v425, 2147483648
        %v438 = vor.u32 1.1754944e-38, %v437
        %v439 = vsel %vm436, %v438, %v434
        %v440 = vmul.f32 %v415, %v439
        %v441 = vmin.f32 %v440, 1.0
        %v442 = vmax.f32 %v441, -1.0
        %v443 = vmul.f32 %v400, %v400
        %v444 = vmin.f32 16.0, %v443
        %v445 = vmul.f32 %v444, 2.1237322e-06
        %v446 = vadd.f32 %v445, 0.00028619796
        %v447 = vmul.f32 %v444, %v446
        %v448 = vadd.f32 %v447, 0.0036580483
        %v449 = vmul.f32 %v444, %v448
        %v450 = vadd.f32 %v449, 0.05243302
        %v451 = vmul.f32 %v444, %v450
        %v452 = vadd.f32 %v451, 0.18741608
        %v453 = vmul.f32 %v444, %v452
        %v454 = vadd.f32 %v453, 1.1283791
        %v455 = vmul.f32 %v400, %v454
        %v456 = vmul.f32 %v444, 3.8918573e-05
        %v457 = vadd.f32 %v456, 0.001143296
        %v458 = vmul.f32 %v444, %v457
        %v459 = vadd.f32 %v458, 0.014752088
        %v460 = vmul.f32 %v444, %v459
        %v461 = vadd.f32 %v460, 0.112945676
        %v462 = vmul.f32 %v444, %v461
        %v463 = vadd.f32 %v462, 0.4994258
        %v464 = vmul.f32 %v444, %v463
        %v465 = vadd.f32 %v464, 1.0
        %v466 = vrcp.pop %v465
        %v467 = vmul.f32 %v465, %v466
        %v468 = vsub.f32 1.0, %v467
        %v469 = vmul.f32 %v466, %v468
        %v470 = vadd.f32 %v466, %v469
        %vm471 = vweird.f32 %v465
        %vm472 = vweird.f32 %v466
        %vm473 = vmor %vm471, %vm472
        %v474 = vsel %vm473, %v466, %v470
        %v475 = vand.u32 2147483647, %v465
        %vm476 = vcmp.eq.f32.partialorder %v475, 8.507059e+37
        %v477 = vand.u32 %v465, 2147483648
        %v478 = vor.u32 1.1754944e-38, %v477
        %v479 = vsel %vm476, %v478, %v474
        %v480 = vmul.f32 %v455, %v479
        %v481 = vmin.f32 %v480, 1.0
        %v482 = vmax.f32 %v481, -1.0
        %v483 = vmul.f32 %v401, %v401
        %v484 = vmin.f32 16.0, %v483
        %v485 = vmul.f32 %v484, 2.1237322e-06
        %v486 = vadd.f32 %v485, 0.00028619796
        %v487 = vmul.f32 %v484, %v486
        %v488 = vadd.f32 %v487, 0.0036580483
        %v489 = vmul.f32 %v484, %v488
        %v490 = vadd.f32 %v489, 0.05243302
        %v491 = vmul.f32 %v484, %v490
        %v492 = vadd.f32 %v491, 0.18741608
        %v493 = vmul.f32 %v484, %v492
        %v494 = vadd.f32 %v493, 1.1283791
        %v495 = vmul.f32 %v401, %v494
        %v496 = vmul.f32 %v484, 3.8918573e-05
        %v497 = vadd.f32 %v496, 0.001143296
        %v498 = vmul.f32 %v484, %v497
        %v499 = vadd.f32 %v498, 0.014752088
        %v500 = vmul.f32 %v484, %v499
        %v501 = vadd.f32 %v500, 0.112945676
        %v502 = vmul.f32 %v484, %v501
        %v503 = vadd.f32 %v502, 0.4994258
        %v504 = vmul.f32 %v484, %v503
        %v505 = vadd.f32 %v504, 1.0
        %v506 = vrcp.pop %v505
        %v507 = vmul.f32 %v505, %v506
        %v508 = vsub.f32 1.0, %v507
        %v509 = vmul.f32 %v506, %v508
        %v510 = vadd.f32 %v506, %v509
        %vm511 = vweird.f32 %v505
        %vm512 = vweird.f32 %v506
        %vm513 = vmor %vm511, %vm512
        %v514 = vsel %vm513, %v506, %v510
        %v515 = vand.u32 2147483647, %v505
        %vm516 = vcmp.eq.f32.partialorder %v515, 8.507059e+37
        %v517 = vand.u32 %v505, 2147483648
        %v518 = vor.u32 1.1754944e-38, %v517
        %v519 = vsel %vm516, %v518, %v514
        %v520 = vmul.f32 %v495, %v519
        %v521 = vmin.f32 %v520, 1.0
        %v522 = vmax.f32 %v521, -1.0
        %v523 = vmul.f32 %v402, %v402
        %v524 = vmin.f32 16.0, %v523
        %v525 = vmul.f32 %v524, 2.1237322e-06
        %v526 = vadd.f32 %v525, 0.00028619796
        %v527 = vmul.f32 %v524, %v526
        %v528 = vadd.f32 %v527, 0.0036580483
        %v529 = vmul.f32 %v524, %v528
        %v530 = vadd.f32 %v529, 0.05243302
        %v531 = vmul.f32 %v524, %v530
        %v532 = vadd.f32 %v531, 0.18741608
        %v533 = vmul.f32 %v524, %v532
        %v534 = vadd.f32 %v533, 1.1283791
        %v535 = vmul.f32 %v402, %v534
        %v536 = vmul.f32 %v524, 3.8918573e-05
        %v537 = vadd.f32 %v536, 0.001143296
        %v538 = vmul.f32 %v524, %v537
        %v539 = vadd.f32 %v538, 0.014752088
        %v540 = vmul.f32 %v524, %v539
        %v541 = vadd.f32 %v540, 0.112945676
        %v542 = vmul.f32 %v524, %v541
        %v543 = vadd.f32 %v542, 0.4994258
        %v544 = vmul.f32 %v524, %v543
        %v545 = vadd.f32 %v544, 1.0
        %v546 = vrcp.pop %v545
        %v547 = vmul.f32 %v545, %v546
        %v548 = vsub.f32 1.0, %v547
        %v549 = vmul.f32 %v546, %v548
        %v550 = vadd.f32 %v546, %v549
        %vm551 = vweird.f32 %v545
        %vm552 = vweird.f32 %v546
        %vm553 = vmor %vm551, %vm552
        %v554 = vsel %vm553, %v546, %v550
        %v555 = vand.u32 2147483647, %v545
        %vm556 = vcmp.eq.f32.partialorder %v555, 8.507059e+37
        %v557 = vand.u32 %v545, 2147483648
        %v558 = vor.u32 1.1754944e-38, %v557
        %v559 = vsel %vm556, %v558, %v554
        %v560 = vmul.f32 %v535, %v559
        %v561 = vmin.f32 %v560, 1.0
        %v562 = vmax.f32 %v561, -1.0
        %v563 = vadd.f32 %v442, 1.0
        %v564 = vadd.f32 %v482, 1.0
        %v565 = vadd.f32 %v522, 1.0
        %v566 = vadd.f32 %v562, 1.0
        %v567 = vmul.f32 %v395, %v563
        %v568 = vmul.f32 %v396, %v564
        %v569 = vmul.f32 %v397, %v565
        %v570 = vmul.f32 %v398, %v566
        %v571 = vld [vmem:[#allocation2] sm:$0xff]
        %v572 = vld [vmem:[%s320] sm:$0x3]
        %v573 = vpack.c.bf16 %v569, %v567
        %v574 = vpack.c.bf16 %v570, %v568
        %vm575 = vcmask 130048
        %v577 = vsel %vm575, %v572, 0
        %579 = vmatpush.bf16.msra.mxu0 0
        %580 = vmatpush.bf16.msra.mxu0 0
        %581 = vmatpush.bf16.msra.mxu0 0
        %582 = vmatpush.bf16.msra.mxu0 0
        %583 = vmatpush.bf16.msra.mxu0 0
        %584 = vmatpush.bf16.msra.mxu0 0
        %585 = vmatpush.bf16.msra.mxu0 0
        %586 = vmatpush.bf16.msra.mxu0 %v573
        %587 = vmatmul.bf16.gmra.mxu0 %v577
        %v588 = vpop.f32.mrf.mxu0
        %v589 = vadd.f32 0.0, %v588
        %v590 = vpop.f32.mrf.mxu0
        %591 = vdwg.mxu0
        %592 = vmatpush.bf16.msra.mxu0 0
        %593 = vmatpush.bf16.msra.mxu0 0
        %594 = vmatpush.bf16.msra.mxu0 0
        %595 = vmatpush.bf16.msra.mxu0 0
        %596 = vmatpush.bf16.msra.mxu0 0
        %597 = vmatpush.bf16.msra.mxu0 0
        %598 = vmatpush.bf16.msra.mxu0 0
        %599 = vmatpush.bf16.msra.mxu0 %v574
        %600 = vmatmul.bf16.gmra.mxu0 %v577
        %v601 = vpop.f32.mrf.mxu0
        %v602 = vadd.f32 0.0, %v601
        %v603 = vpop.f32.mrf.mxu0
        %604 = vdwg.mxu0
        %v607 = vrot.slane %v602, 4
        %vm608 = vcmask 1043456
        %v609 = vsel %vm608, %v589, %v607
        %v611 = vadd.f32 %v571, %v609
        %612 = vst [vmem:[#allocation2] sm:$0xff] %v611
        // Predicated region
        $region45: #{tpu_custom_call.1} parent=39 // pred_check
          %p613 = pneg %p323
        $region46: #{tpu_custom_call.1} parent=39 // pred_check_branch
          %615 = sbr.rel (%p613) target = $region48
        $region47: #{tpu_custom_call.1} parent=39 // pred_region
          %v616 = vld [vmem:[#allocation2] sm:$0xff]
          %v617 = vld [vmem:[%s4] sm:$0xf]
          %619 = vset.pattern.permute.xlu0 0
          %620 = vperm.xlu0 %619, %v617
          %v621 = vpop.permute.xlu0 %620
          %v623 = vunpack.c.l.s4 839922192
          %v624 = vunpack.c.0.s8 %v623
          %v625 = vperm.slane %v621, %v624
          %v627 = vadd.f32 %v616, %v625
          %628 = vst [vmem:[%s294] sm:$0xff] %v627
        $region48: #{tpu_custom_call.1} parent=39 // pred_fallthru
          _
        %s629 = sand.u32 %s175, 1
        %s630 = scalar_lea.sflag [#allocation4], %s629
        %s631 = sand.u32 %s175, 1
        %s632 = smul.addr %s631, 8
        %s633 = scalar_lea.vmem [#allocation3], %s632
        // Predicated region
        $region49: #{tpu_custom_call.1} parent=39 // pred_check
          %p634 = pneg %p185
        $region50: #{tpu_custom_call.1} parent=39 // pred_check_branch
          %636 = sbr.rel (%p634) target = $region52
        $region51: #{tpu_custom_call.1} parent=39 // pred_region
          %s637 = smul.u32 2, %s25
          %639 = vsyncadd %s630, 0
          %s640 = smul.addr %s24, 2
          %s641 = sadd.s32 %s637, %s640
          %s642 = smul.addr %s641, 4
          %s643 = scalar_lea.hbm %s5, %s642
          %s645 = sshll.u32 %s633, 4
          %s646 = int_to_ptr.vmem [resolvable:$true] %s645
          %s647 = sshll.u32 %s643, 4
          %s648 = int_to_ptr.hbm [resolvable:$true] %s647
          %650 = dma.vmem_to_hbm [thread:$0]  %s646, 128, %s648, %s630
        $region52: #{tpu_custom_call.1} parent=39 // pred_fallthru
          _
      $region40: #{tpu_custom_call.1} parent=5 // pred_fallthru
        _
      %p651 = scmp.le.s32.totalorder 2, %s14
      // Predicated region
      $region53: #{tpu_custom_call.1} parent=5 // pred_check
        %p652 = pneg %p651
      $region54: #{tpu_custom_call.1} parent=5 // pred_check_branch
        %654 = sbr.rel (%p652) target = $region56
      $region55: #{tpu_custom_call.1} parent=5 // pred_region
        %s655 = ssub.s32 %s14, 2
        // Predicated region
        $region57: #{tpu_custom_call.1} parent=55 // pred_check
          %p656 = pneg %p191
        $region58: #{tpu_custom_call.1} parent=55 // pred_check_branch
          %658 = sbr.rel (%p656) target = $region60
        $region59: #{tpu_custom_call.1} parent=55 // pred_region
          %s659 = sand.u32 %s176, 1
          %s660 = scalar_lea.sflag [#allocation4], %s659
          %s661 = sand.u32 %s176, 1
          %s662 = smul.addr %s661, 8
          %s663 = scalar_lea.vmem [#allocation3], %s662
          %665 = dma.done %s660, 128
        $region60: #{tpu_custom_call.1} parent=55 // pred_fallthru
          _
      $region56: #{tpu_custom_call.1} parent=5 // pred_fallthru
        _
    $region6: #{tpu_custom_call.1} parent=1 // loop_footer
      %s18 = sadd.s32 1, %s14
    $region7: #{tpu_custom_call.1} parent=1 // loop_footer_branch
      %13 = sbr.rel target = $region3
    $region8: #{tpu_custom_call.1} parent=1 // loop_exit
      _
    %666 = vsyncpa [#allocation4], 1
    %s667 = scalar_lea.sflag [#allocation4], 1
    %668 = vsyncpa %s667, 1

// kernel: tpu_custom_call.1
$region0: #{tpu_custom_call.1}
  #allocation0 [shape = 'u32[]', space=smem, size = 0x4, offset = 0x4, fixed_abs, tag = 'smem constant byte address 0x4 - core index']
  #allocation1 [shape = 'u32[72,128]{1,0:T(1,128)}', space=vmem, size = 0x9000, scoped, tag = 'internal scratch']
  #allocation2 [shape = 'f32[4,256]{1,0:T(4,128)}', space=vmem, size = 0x1000, scoped, tag = 'scratch operand']
  %s0 = inlined_call_operand.vmem [shape: f32[2,4,256], index: 0, kind: input, shape index: {}]
  %s1 = inlined_call_operand.vmem [shape: bf16[16,4], index: 1, kind: input, shape index: {}]
  %s2 = inlined_call_operand.vmem [shape: f32[16,1], index: 2, kind: input, shape index: {}]
  %s3 = inlined_call_operand.vmem [shape: bf16[4,16], index: 3, kind: input, shape index: {}]
  %s4 = inlined_call_operand.vmem [shape: f32[4,1], index: 4, kind: input, shape index: {}]
  %s5 = inlined_call_operand.hbm [shape: f32[2,4,256], index: 5, kind: output, shape index: {}]
  %s6 = sld [smem:[#allocation0]]
  $region61: #{tpu_custom_call.1} parent=0
    _
  %s8 = ssub.s32 1, %s6
  %s9 = scalar_select 0, %s8, %s6
  $region1: #{tpu_custom_call.1} parent=0
    #allocation3 [shape = 'u8[8192]{0}', space=vmem, size = 0x2000, scoped, tag = 'output window, operand 0']
    #allocation4 [shape = 's32[2]{0}', space=sflag, size = 0x8, scoped, tag = 'scoped memory for tpu_custom_call.1']
    %10 = vsyncpa [#allocation4], 0
    %s11 = scalar_lea.sflag [#allocation4], 1
    %12 = vsyncpa %s11, 0
    loop: start=0, step=1, limit=4
    $region2: #{tpu_custom_call.1} parent=1 // loop_pre_header
      _
    $region3: #{tpu_custom_call.1} parent=1 // loop_header
      %s14 = sphi 0, %s18
      %p15 = scmp.ge.s32.totalorder %s14, 4
      %s21 = sphi 0, %s40
      %s22 = sphi 0, %s36
      %s23 = sphi 0, %s32
      %s24 = sphi 0, %s21
      %s25 = sphi 0, %s22
      %s26 = sphi 0, %s23
      %s27 = sphi 0, %s24
      %s28 = sphi 0, %s25
      %s29 = sphi 0, %s26
      %s45 = sphi 0, %s47
      %s48 = sphi 0, %s45
      %s49 = sphi 0, %s48
      %s65 = sphi 0, %s49
      %s71 = sphi 0, %s73
      %s74 = sphi 0, %s71
      %s75 = sphi 0, %s74
      %s91 = sphi 0, %s75
      %s97 = sphi 0, %s99
      %s100 = sphi 0, %s97
      %s101 = sphi 0, %s100
      %s117 = sphi 0, %s101
      %s123 = sphi 0, %s125
      %s126 = sphi 0, %s123
      %s127 = sphi 0, %s126
      %s143 = sphi 0, %s127
      %s147 = sphi 0, %s147
      %s149 = sphi 0, %s147
      %s150 = sphi 0, %s149
      %s164 = sphi 0, %s150
      %s172 = sphi 0, %s174
      %s175 = sphi 0, %s172
      %s176 = sphi 0, %s175
      %s192 = sphi 0, %s176
    $region4: #{tpu_custom_call.1} parent=1 // loop_header_branch
      %17 = sbr.rel (%p15) target = $region8
    $region5: #{tpu_custom_call.1} parent=1 // loop_body
      %s19 = ssub.s32 %s14, 1
      %s20 = ssub.s32 %s14, 2
      %s30 = sadd.s32 1, %s23
      %p31 = scmp.ge.s32.totalorder %s30, 1
      %s32 = scalar_select %p31, 0, %s30
      %s33 = sadd.s32 1, %s22
      %s34 = scalar_select %p31, %s33, %s22
      %p35 = scmp.ge.s32.totalorder %s34, 1
      %s36 = scalar_select %p35, 0, %s34
      %s37 = sadd.s32 1, %s21
      %s38 = scalar_select %p35, %s37, %s21
      %p39 = scmp.ge.s32.totalorder %s38, 2
      %s40 = scalar_select %p39, 0, %s38
      %s41 = ssub.s32 %s21, %s40
      %s42 = ssub.s32 %s22, %s36
      %s43 = sor.u32 %s41, %s42
      %p44 = scmp.eq.s32.totalorder %s43, 0
      %s46 = sadd.s32 %s45, 1
      %s47 = scalar_select %p44, %s45, %s46
      %p50 = pneg %p44
      %p51 = scmp.eq.s32.totalorder %s14, 1
      %p52 = por %p50, %p51
      %p53 = scmp.ne.s32.totalorder %s45, %s48
      %p54 = scmp.eq.s32.totalorder %s14, 0
      %p55 = por %p53, %p54
      %p56 = scmp.ne.s32.totalorder %s45, %s48
      %p57 = scmp.eq.s32.totalorder %s19, 1
      %p58 = por %p56, %p57
      %p59 = scmp.ne.s32.totalorder %s48, %s49
      %p60 = scmp.eq.s32.totalorder %s19, 0
      %p61 = por %p59, %p60
      %p62 = scmp.ne.s32.totalorder %s48, %s49
      %p63 = scmp.eq.s32.totalorder %s20, 1
      %p64 = por %p62, %p63
      %p66 = scmp.ne.s32.totalorder %s49, %s65
      %p67 = scmp.eq.s32.totalorder %s20, 0
      %p68 = por %p66, %p67
      %s69 = ssub.s32 %s23, %s32
      %p70 = scmp.eq.s32.totalorder %s69, 0
      %s72 = sadd.s32 %s71, 1
      %s73 = scalar_select %p70, %s71, %s72
      %p76 = pneg %p70
      %p77 = scmp.eq.s32.totalorder %s14, 1
      %p78 = por %p76, %p77
      %p79 = scmp.ne.s32.totalorder %s71, %s74
      %p80 = scmp.eq.s32.totalorder %s14, 0
      %p81 = por %p79, %p80
      %p82 = scmp.ne.s32.totalorder %s71, %s74
      %p83 = scmp.eq.s32.totalorder %s19, 1
      %p84 = por %p82, %p83
      %p85 = scmp.ne.s32.totalorder %s74, %s75
      %p86 = scmp.eq.s32.totalorder %s19, 0
      %p87 = por %p85, %p86
      %p88 = scmp.ne.s32.totalorder %s74, %s75
      %p89 = scmp.eq.s32.totalorder %s20, 1
      %p90 = por %p88, %p89
      %p92 = scmp.ne.s32.totalorder %s75, %s91
      %p93 = scmp.eq.s32.totalorder %s20, 0
      %p94 = por %p92, %p93
      %s95 = ssub.s32 %s23, %s32
      %p96 = scmp.eq.s32.totalorder %s95, 0
      %s98 = sadd.s32 %s97, 1
      %s99 = scalar_select %p96, %s97, %s98
      %p102 = pneg %p96
      %p103 = scmp.eq.s32.totalorder %s14, 1
      %p104 = por %p102, %p103
      %p105 = scmp.ne.s32.totalorder %s97, %s100
      %p106 = scmp.eq.s32.totalorder %s14, 0
      %p107 = por %p105, %p106
      %p108 = scmp.ne.s32.totalorder %s97, %s100
      %p109 = scmp.eq.s32.totalorder %s19, 1
      %p110 = por %p108, %p109
      %p111 = scmp.ne.s32.totalorder %s100, %s101
      %p112 = scmp.eq.s32.totalorder %s19, 0
      %p113 = por %p111, %p112
      %p114 = scmp.ne.s32.totalorder %s100, %s101
      %p115 = scmp.eq.s32.totalorder %s20, 1
      %p116 = por %p114, %p115
      %p118 = scmp.ne.s32.totalorder %s101, %s117
      %p119 = scmp.eq.s32.totalorder %s20, 0
      %p120 = por %p118, %p119
      %s121 = ssub.s32 %s23, %s32
      %p122 = scmp.eq.s32.totalorder %s121, 0
      %s124 = sadd.s32 %s123, 1
      %s125 = scalar_select %p122, %s123, %s124
      %p128 = pneg %p122
      %p129 = scmp.eq.s32.totalorder %s14, 1
      %p130 = por %p128, %p129
      %p131 = scmp.ne.s32.totalorder %s123, %s126
      %p132 = scmp.eq.s32.totalorder %s14, 0
      %p133 = por %p131, %p132
      %p134 = scmp.ne.s32.totalorder %s123, %s126
      %p135 = scmp.eq.s32.totalorder %s19, 1
      %p136 = por %p134, %p135
      %p137 = scmp.ne.s32.totalorder %s126, %s127
      %p138 = scmp.eq.s32.totalorder %s19, 0
      %p139 = por %p137, %p138
      %p140 = scmp.ne.s32.totalorder %s126, %s127
      %p141 = scmp.eq.s32.totalorder %s20, 1
      %p142 = por %p140, %p141
      %p144 = scmp.ne.s32.totalorder %s127, %s143
      %p145 = scmp.eq.s32.totalorder %s20, 0
      %p146 = por %p144, %p145
      %s148 = sadd.s32 %s147, 1
      %p151 = scmp.eq.s32.totalorder %s14, 1
      %p152 = scmp.ne.s32.totalorder %s147, %s149
      %p153 = scmp.eq.s32.totalorder %s14, 0
      %p154 = por %p152, %p153
      %p155 = scmp.ne.s32.totalorder %s147, %s149
      %p156 = scmp.eq.s32.totalorder %s19, 1
      %p157 = por %p155, %p156
      %p158 = scmp.ne.s32.totalorder %s149, %s150
      %p159 = scmp.eq.s32.totalorder %s19, 0
      %p160 = por %p158, %p159
      %p161 = scmp.ne.s32.totalorder %s149, %s150
      %p162 = scmp.eq.s32.totalorder %s20, 1
      %p163 = por %p161, %p162
      %p165 = scmp.ne.s32.totalorder %s150, %s164
      %p166 = scmp.eq.s32.totalorder %s20, 0
      %p167 = por %p165, %p166
      %s168 = ssub.s32 %s21, %s40
      %s169 = ssub.s32 %s22, %s36
      %s170 = sor.u32 %s168, %s169
      %p171 = scmp.eq.s32.totalorder %s170, 0
      %s173 = sadd.s32 %s172, 1
      %s174 = scalar_select %p171, %s172, %s173
      %p177 = pneg %p171
      %p178 = scmp.eq.s32.totalorder %s14, 1
      %p179 = por %p177, %p178
      %p180 = scmp.ne.s32.totalorder %s172, %s175
      %p181 = scmp.eq.s32.totalorder %s14, 0
      %p182 = por %p180, %p181
      %p183 = scmp.ne.s32.totalorder %s172, %s175
      %p184 = scmp.eq.s32.totalorder %s19, 1
      %p185 = por %p183, %p184
      %p186 = scmp.ne.s32.totalorder %s175, %s176
      %p187 = scmp.eq.s32.totalorder %s19, 0
      %p188 = por %p186, %p187
      %p189 = scmp.ne.s32.totalorder %s175, %s176
      %p190 = scmp.eq.s32.totalorder %s20, 1
      %p191 = por %p189, %p190
      %p193 = scmp.ne.s32.totalorder %s176, %s192
      %p194 = scmp.eq.s32.totalorder %s20, 0
      %p195 = por %p193, %p194
      %p196 = scmp.le.s32.totalorder 1, %s14
      %p197 = scmp.lt.s32.totalorder %s14, 3
      %p198 = pnand %p196, %p197
      %p199 = pneg %p198
      // Predicated region
      $region9: #{tpu_custom_call.1} parent=5 // pred_check
        _
      $region10: #{tpu_custom_call.1} parent=5 // pred_check_branch
        %201 = sbr.rel (%p198) target = $region12
      $region11: #{tpu_custom_call.1} parent=5 // pred_region
        %s202 = ssub.s32 %s14, 1
        // Predicated region
        $region13: #{tpu_custom_call.1} parent=11 // pred_check
          %p203 = pneg %p87
        $region14: #{tpu_custom_call.1} parent=11 // pred_check_branch
          %205 = sbr.rel (%p203) target = $region16
        $region15: #{tpu_custom_call.1} parent=11 // pred_region
          %s206 = smul.u32 2, %s26
          %p207 = scmp.lt.s32.totalorder %s206, 1
          %s208 = scalar_select %p207, %s206, 1
          %s209 = smul.addr %s208, 4
          %s210 = scalar_lea.vmem %s1, %s209
          %s211 = smul.u32 2, %s26
        $region16: #{tpu_custom_call.1} parent=11 // pred_fallthru
          _
        // Predicated region
        $region17: #{tpu_custom_call.1} parent=11 // pred_check
          %p212 = pneg %p113
        $region18: #{tpu_custom_call.1} parent=11 // pred_check_branch
          %214 = sbr.rel (%p212) target = $region20
        $region19: #{tpu_custom_call.1} parent=11 // pred_region
          %s215 = smul.u32 2, %s26
          %p216 = scmp.lt.s32.totalorder %s215, 1
          %s217 = scalar_select %p216, %s215, 1
          %s218 = smul.addr %s217, 8
          %s219 = scalar_lea.vmem %s2, %s218
          %s220 = smul.u32 2, %s26
        $region20: #{tpu_custom_call.1} parent=11 // pred_fallthru
          _
        // Predicated region
        $region21: #{tpu_custom_call.1} parent=11 // pred_check
          %p221 = pneg %p139
        $region22: #{tpu_custom_call.1} parent=11 // pred_check_branch
          %223 = sbr.rel (%p221) target = $region24
        $region23: #{tpu_custom_call.1} parent=11 // pred_region
          %p224 = scmp.lt.s32.totalorder %s26, 0
          %s225 = scalar_select %p224, %s26, 0
          %s226 = smul.addr %s225, 2
          %s227 = scalar_lea.vmem %s3, %s226
        $region24: #{tpu_custom_call.1} parent=11 // pred_fallthru
          _
        // Predicated region
        $region25: #{tpu_custom_call.1} parent=11 // pred_check
          %p228 = pneg %p160
        $region26: #{tpu_custom_call.1} parent=11 // pred_check_branch
          %230 = sbr.rel (%p228) target = $region28
        $region27: #{tpu_custom_call.1} parent=11 // pred_region
          _
        $region28: #{tpu_custom_call.1} parent=11 // pred_fallthru
          _
      $region12: #{tpu_custom_call.1} parent=5 // pred_fallthru
        _
      %p231 = scmp.lt.s32.totalorder %s14, 2
      // Predicated region
      $region29: #{tpu_custom_call.1} parent=5 // pred_check
        %p232 = pneg %p231
      $region30: #{tpu_custom_call.1} parent=5 // pred_check_branch
        %234 = sbr.rel (%p232) target = $region32
      $region31: #{tpu_custom_call.1} parent=5 // pred_region
        // Predicated region
        $region33: #{tpu_custom_call.1} parent=31 // pred_check
          %p235 = pneg %p55
        $region34: #{tpu_custom_call.1} parent=31 // pred_check_branch
          %237 = sbr.rel (%p235) target = $region36
        $region35: #{tpu_custom_call.1} parent=31 // pred_region
          %s238 = smul.u32 2, %s22
          %p239 = scmp.lt.s32.totalorder %s21, 1
          %s240 = scalar_select %p239, %s21, 1
          %p241 = scmp.lt.s32.totalorder %s238, 1
          %s242 = scalar_select %p241, %s238, 1
          %s243 = smul.addr %s240, 2
          %s244 = sadd.s32 %s242, %s243
          %s245 = smul.addr %s244, 4
          %s246 = scalar_lea.vmem %s0, %s245
          %s247 = smul.u32 2, %s22
        $region36: #{tpu_custom_call.1} parent=31 // pred_fallthru
          _
      $region32: #{tpu_custom_call.1} parent=5 // pred_fallthru
        _
      %p248 = scmp.le.s32.totalorder 1, %s14
      %p249 = scmp.lt.s32.totalorder %s14, 3
      %p250 = pnand %p248, %p249
      %p251 = pneg %p250
      // Predicated region
      $region37: #{tpu_custom_call.1} parent=5 // pred_check
        _
      $region38: #{tpu_custom_call.1} parent=5 // pred_check_branch
        %253 = sbr.rel (%p250) target = $region40
      $region39: #{tpu_custom_call.1} parent=5 // pred_region
        %s254 = ssub.s32 %s14, 1
        %s255 = smul.u32 2, %s25
        %p256 = scmp.lt.s32.totalorder %s24, 1
        %s257 = scalar_select %p256, %s24, 1
        %p258 = scmp.lt.s32.totalorder %s255, 1
        %s259 = scalar_select %p258, %s255, 1
        %s260 = smul.addr %s257, 2
        %s261 = sadd.s32 %s259, %s260
        %s262 = smul.addr %s261, 4
        %s263 = scalar_lea.vmem %s0, %s262
        %p264 = pneg %p61
        %p265 = pneg %p58
        %s266 = smul.u32 2, %s26
        %p267 = scmp.lt.s32.totalorder %s266, 1
        %s268 = scalar_select %p267, %s266, 1
        %s269 = smul.addr %s268, 4
        %s270 = scalar_lea.vmem %s1, %s269
        %p271 = pneg %p87
        %p272 = pneg %p84
        %s273 = smul.u32 2, %s26
        %p274 = scmp.lt.s32.totalorder %s273, 1
        %s275 = scalar_select %p274, %s273, 1
        %s276 = smul.addr %s275, 8
        %s277 = scalar_lea.vmem %s2, %s276
        %p278 = pneg %p113
        %p279 = pneg %p110
        %p280 = scmp.lt.s32.totalorder %s26, 0
        %s281 = scalar_select %p280, %s26, 0
        %s282 = smul.addr %s281, 2
        %s283 = scalar_lea.vmem %s3, %s282
        %p284 = pneg %p139
        %p285 = pneg %p136
        %p286 = pneg %p160
        %p287 = pneg %p157
        %p288 = pneg %p188
        %p289 = pneg %p185
        %s290 = sand.u32 %s175, 1
        %s291 = scalar_lea.sflag [#allocation4], %s290
        %s292 = sand.u32 %s175, 1
        %s293 = smul.addr %s292, 8
        %s294 = scalar_lea.vmem [#allocation3], %s293
        %s295 = smul.u32 2, %s25
        %p296 = scmp.lt.s32.totalorder %s24, 1
        %s297 = scalar_select %p296, %s24, 1
        %p298 = scmp.lt.s32.totalorder %s295, 1
        %s299 = scalar_select %p298, %s295, 1
        %s300 = smul.addr %s297, 2
        %s301 = sadd.s32 %s299, %s300
        %s302 = smul.addr %s301, 4
        %s303 = scalar_lea.vmem %s0, %s302
        %s304 = smul.u32 2, %s25
        %s305 = smul.u32 2, %s26
        %p306 = scmp.lt.s32.totalorder %s305, 1
        %s307 = scalar_select %p306, %s305, 1
        %s308 = smul.addr %s307, 4
        %s309 = scalar_lea.vmem %s1, %s308
        %s310 = smul.u32 2, %s26
        %s311 = smul.u32 2, %s26
        %p312 = scmp.lt.s32.totalorder %s311, 1
        %s313 = scalar_select %p312, %s311, 1
        %s314 = smul.addr %s313, 8
        %s315 = scalar_lea.vmem %s2, %s314
        %s316 = smul.u32 2, %s26
        %p317 = scmp.lt.s32.totalorder %s26, 0
        %s318 = scalar_select %p317, %s26, 0
        %s319 = smul.addr %s318, 2
        %s320 = scalar_lea.vmem %s3, %s319
        %s321 = smul.u32 2, %s25
        %p323 = scmp.eq.s32.totalorder %s26, 0
        // Predicated region
        $region41: #{tpu_custom_call.1} parent=39 // pred_check
          %p324 = pneg %p323
        $region42: #{tpu_custom_call.1} parent=39 // pred_check_branch
          %326 = sbr.rel (%p324) target = $region44
        $region43: #{tpu_custom_call.1} parent=39 // pred_region
          %327 = vst [vmem:[#allocation2] sm:$0xff] 0.0
        $region44: #{tpu_custom_call.1} parent=39 // pred_fallthru
          _
        %v328 = vld [vmem:[%s303] sm:$0xff]
        %330 = vst [vmem:[#allocation1] ss:$2 sm:$0xff] %v328
        %v331 = vld.sshfl [vmem:[#allocation1] sm:$0xff pattern:$0x75316420]
        %v332 = vld.sshfl [vmem:[#allocation1 + $0x8] sm:$0xff pattern:$0x75316420]
        %v335 = vpack.c.bf16 %v331, %v331
        %v336 = vpack.c.bf16 %v332, %v332
        %v337 = vld [vmem:[%s309] sm:$0xf]
        %v338 = vld [vmem:[%s309 + $0x4] sm:$0xf]
        %v339 = vld [vmem:[%s315] sm:$0xff]
        %v340 = vld [vmem:[%s315 + $0x8] sm:$0xff]
        %342 = vset.pattern.permute.xlu0 0
        %343 = vperm.xlu0 %342, %v339
        %v344 = vpop.permute.xlu0 %343
        %347 = vset.pattern.permute.xlu0 0
        %348 = vperm.xlu0 %347, %v340
        %v349 = vpop.permute.xlu0 %348
        %v353 = vunpack.c.l.b16 %v337
        %v354 = vunpack.c.l.b16 %v338
        %v355 = vpack.c.b16 %v354, %v353
        %vm356 = vcmask 31744
        %v358 = vsel %vm356, %v355, 0
        %vm360 = vcmask 1041408
        %v362 = vsel %vm360, %v335, 0
        %v365 = vsel %vm360, %v336, 0
        %367 = vmatpush.bf16.msra.mxu0 0
        %368 = vmatpush.bf16.msra.mxu0 0
        %369 = vmatpush.bf16.msra.mxu0 0
        %370 = vmatpush.bf16.msra.mxu0 0
        %371 = vmatpush.bf16.msra.mxu0 0
        %372 = vmatpush.bf16.msra.mxu0 0
        %373 = vmatpush.bf16.msra.mxu0 0
        %374 = vmatpush.bf16.msra.mxu0 %v362
        %375 = vmatmul.bf16.gmra.mxu0 %v358
        %v376 = vpop.f32.mrf.mxu0
        %v377 = vadd.f32 %v344, %v376
        %v378 = vpop.f32.mrf.mxu0
        %v379 = vadd.f32 %v349, %v378
        %380 = vdwg.mxu0
        %381 = vmatpush.bf16.msra.mxu0 0
        %382 = vmatpush.bf16.msra.mxu0 0
        %383 = vmatpush.bf16.msra.mxu0 0
        %384 = vmatpush.bf16.msra.mxu0 0
        %385 = vmatpush.bf16.msra.mxu0 0
        %386 = vmatpush.bf16.msra.mxu0 0
        %387 = vmatpush.bf16.msra.mxu0 0
        %388 = vmatpush.bf16.msra.mxu0 %v365
        %389 = vmatmul.bf16.gmra.mxu0 %v358
        %v390 = vpop.f32.mrf.mxu0
        %v391 = vadd.f32 %v344, %v390
        %v392 = vpop.f32.mrf.mxu0
        %v393 = vadd.f32 %v349, %v392
        %394 = vdwg.mxu0
        %v395 = vmul.f32 %v377, 0.5
        %v396 = vmul.f32 %v391, 0.5
        %v397 = vmul.f32 %v379, 0.5
        %v398 = vmul.f32 %v393, 0.5
        %v399 = vmul.f32 %v377, 0.70710677
        %v400 = vmul.f32 %v391, 0.70710677
        %v401 = vmul.f32 %v379, 0.70710677
        %v402 = vmul.f32 %v393, 0.70710677
        %v403 = vmul.f32 %v399, %v399
        %v404 = vmin.f32 16.0, %v403
        %v405 = vmul.f32 %v404, 2.1237322e-06
        %v406 = vadd.f32 %v405, 0.00028619796
        %v407 = vmul.f32 %v404, %v406
        %v408 = vadd.f32 %v407, 0.0036580483
        %v409 = vmul.f32 %v404, %v408
        %v410 = vadd.f32 %v409, 0.05243302
        %v411 = vmul.f32 %v404, %v410
        %v412 = vadd.f32 %v411, 0.18741608
        %v413 = vmul.f32 %v404, %v412
        %v414 = vadd.f32 %v413, 1.1283791
        %v415 = vmul.f32 %v399, %v414
        %v416 = vmul.f32 %v404, 3.8918573e-05
        %v417 = vadd.f32 %v416, 0.001143296
        %v418 = vmul.f32 %v404, %v417
        %v419 = vadd.f32 %v418, 0.014752088
        %v420 = vmul.f32 %v404, %v419
        %v421 = vadd.f32 %v420, 0.112945676
        %v422 = vmul.f32 %v404, %v421
        %v423 = vadd.f32 %v422, 0.4994258
        %v424 = vmul.f32 %v404, %v423
        %v425 = vadd.f32 %v424, 1.0
        %v426 = vrcp.pop %v425
        %v427 = vmul.f32 %v425, %v426
        %v428 = vsub.f32 1.0, %v427
        %v429 = vmul.f32 %v426, %v428
        %v430 = vadd.f32 %v426, %v429
        %vm431 = vweird.f32 %v425
        %vm432 = vweird.f32 %v426
        %vm433 = vmor %vm431, %vm432
        %v434 = vsel %vm433, %v426, %v430
        %v435 = vand.u32 2147483647, %v425
        %vm436 = vcmp.eq.f32.partialorder %v435, 8.507059e+37
        %v437 = vand.u32 %v425, 2147483648
        %v438 = vor.u32 1.1754944e-38, %v437
        %v439 = vsel %vm436, %v438, %v434
        %v440 = vmul.f32 %v415, %v439
        %v441 = vmin.f32 %v440, 1.0
        %v442 = vmax.f32 %v441, -1.0
        %v443 = vmul.f32 %v400, %v400
        %v444 = vmin.f32 16.0, %v443
        %v445 = vmul.f32 %v444, 2.1237322e-06
        %v446 = vadd.f32 %v445, 0.00028619796
        %v447 = vmul.f32 %v444, %v446
        %v448 = vadd.f32 %v447, 0.0036580483
        %v449 = vmul.f32 %v444, %v448
        %v450 = vadd.f32 %v449, 0.05243302
        %v451 = vmul.f32 %v444, %v450
        %v452 = vadd.f32 %v451, 0.18741608
        %v453 = vmul.f32 %v444, %v452
        %v454 = vadd.f32 %v453, 1.1283791
        %v455 = vmul.f32 %v400, %v454
        %v456 = vmul.f32 %v444, 3.8918573e-05
        %v457 = vadd.f32 %v456, 0.001143296
        %v458 = vmul.f32 %v444, %v457
        %v459 = vadd.f32 %v458, 0.014752088
        %v460 = vmul.f32 %v444, %v459
        %v461 = vadd.f32 %v460, 0.112945676
        %v462 = vmul.f32 %v444, %v461
        %v463 = vadd.f32 %v462, 0.4994258
        %v464 = vmul.f32 %v444, %v463
        %v465 = vadd.f32 %v464, 1.0
        %v466 = vrcp.pop %v465
        %v467 = vmul.f32 %v465, %v466
        %v468 = vsub.f32 1.0, %v467
        %v469 = vmul.f32 %v466, %v468
        %v470 = vadd.f32 %v466, %v469
        %vm471 = vweird.f32 %v465
        %vm472 = vweird.f32 %v466
        %vm473 = vmor %vm471, %vm472
        %v474 = vsel %vm473, %v466, %v470
        %v475 = vand.u32 2147483647, %v465
        %vm476 = vcmp.eq.f32.partialorder %v475, 8.507059e+37
        %v477 = vand.u32 %v465, 2147483648
        %v478 = vor.u32 1.1754944e-38, %v477
        %v479 = vsel %vm476, %v478, %v474
        %v480 = vmul.f32 %v455, %v479
        %v481 = vmin.f32 %v480, 1.0
        %v482 = vmax.f32 %v481, -1.0
        %v483 = vmul.f32 %v401, %v401
        %v484 = vmin.f32 16.0, %v483
        %v485 = vmul.f32 %v484, 2.1237322e-06
        %v486 = vadd.f32 %v485, 0.00028619796
        %v487 = vmul.f32 %v484, %v486
        %v488 = vadd.f32 %v487, 0.0036580483
        %v489 = vmul.f32 %v484, %v488
        %v490 = vadd.f32 %v489, 0.05243302
        %v491 = vmul.f32 %v484, %v490
        %v492 = vadd.f32 %v491, 0.18741608
        %v493 = vmul.f32 %v484, %v492
        %v494 = vadd.f32 %v493, 1.1283791
        %v495 = vmul.f32 %v401, %v494
        %v496 = vmul.f32 %v484, 3.8918573e-05
        %v497 = vadd.f32 %v496, 0.001143296
        %v498 = vmul.f32 %v484, %v497
        %v499 = vadd.f32 %v498, 0.014752088
        %v500 = vmul.f32 %v484, %v499
        %v501 = vadd.f32 %v500, 0.112945676
        %v502 = vmul.f32 %v484, %v501
        %v503 = vadd.f32 %v502, 0.4994258
        %v504 = vmul.f32 %v484, %v503
        %v505 = vadd.f32 %v504, 1.0
        %v506 = vrcp.pop %v505
        %v507 = vmul.f32 %v505, %v506
        %v508 = vsub.f32 1.0, %v507
        %v509 = vmul.f32 %v506, %v508
        %v510 = vadd.f32 %v506, %v509
        %vm511 = vweird.f32 %v505
        %vm512 = vweird.f32 %v506
        %vm513 = vmor %vm511, %vm512
        %v514 = vsel %vm513, %v506, %v510
        %v515 = vand.u32 2147483647, %v505
        %vm516 = vcmp.eq.f32.partialorder %v515, 8.507059e+37
        %v517 = vand.u32 %v505, 2147483648
        %v518 = vor.u32 1.1754944e-38, %v517
        %v519 = vsel %vm516, %v518, %v514
        %v520 = vmul.f32 %v495, %v519
        %v521 = vmin.f32 %v520, 1.0
        %v522 = vmax.f32 %v521, -1.0
        %v523 = vmul.f32 %v402, %v402
        %v524 = vmin.f32 16.0, %v523
        %v525 = vmul.f32 %v524, 2.1237322e-06
        %v526 = vadd.f32 %v525, 0.00028619796
        %v527 = vmul.f32 %v524, %v526
        %v528 = vadd.f32 %v527, 0.0036580483
        %v529 = vmul.f32 %v524, %v528
        %v530 = vadd.f32 %v529, 0.05243302
        %v531 = vmul.f32 %v524, %v530
        %v532 = vadd.f32 %v531, 0.18741608
        %v533 = vmul.f32 %v524, %v532
        %v534 = vadd.f32 %v533, 1.1283791
        %v535 = vmul.f32 %v402, %v534
        %v536 = vmul.f32 %v524, 3.8918573e-05
        %v537 = vadd.f32 %v536, 0.001143296
        %v538 = vmul.f32 %v524, %v537
        %v539 = vadd.f32 %v538, 0.014752088
        %v540 = vmul.f32 %v524, %v539
        %v541 = vadd.f32 %v540, 0.112945676
        %v542 = vmul.f32 %v524, %v541
        %v543 = vadd.f32 %v542, 0.4994258
        %v544 = vmul.f32 %v524, %v543
        %v545 = vadd.f32 %v544, 1.0
        %v546 = vrcp.pop %v545
        %v547 = vmul.f32 %v545, %v546
        %v548 = vsub.f32 1.0, %v547
        %v549 = vmul.f32 %v546, %v548
        %v550 = vadd.f32 %v546, %v549
        %vm551 = vweird.f32 %v545
        %vm552 = vweird.f32 %v546
        %vm553 = vmor %vm551, %vm552
        %v554 = vsel %vm553, %v546, %v550
        %v555 = vand.u32 2147483647, %v545
        %vm556 = vcmp.eq.f32.partialorder %v555, 8.507059e+37
        %v557 = vand.u32 %v545, 2147483648
        %v558 = vor.u32 1.1754944e-38, %v557
        %v559 = vsel %vm556, %v558, %v554
        %v560 = vmul.f32 %v535, %v559
        %v561 = vmin.f32 %v560, 1.0
        %v562 = vmax.f32 %v561, -1.0
        %v563 = vadd.f32 %v442, 1.0
        %v564 = vadd.f32 %v482, 1.0
        %v565 = vadd.f32 %v522, 1.0
        %v566 = vadd.f32 %v562, 1.0
        %v567 = vmul.f32 %v395, %v563
        %v568 = vmul.f32 %v396, %v564
        %v569 = vmul.f32 %v397, %v565
        %v570 = vmul.f32 %v398, %v566
        %v571 = vld [vmem:[#allocation2] sm:$0xff]
        %v572 = vld [vmem:[%s320] sm:$0x3]
        %v573 = vpack.c.bf16 %v569, %v567
        %v574 = vpack.c.bf16 %v570, %v568
        %vm575 = vcmask 130048
        %v577 = vsel %vm575, %v572, 0
        %579 = vmatpush.bf16.msra.mxu0 0
        %580 = vmatpush.bf16.msra.mxu0 0
        %581 = vmatpush.bf16.msra.mxu0 0
        %582 = vmatpush.bf16.msra.mxu0 0
        %583 = vmatpush.bf16.msra.mxu0 0
        %584 = vmatpush.bf16.msra.mxu0 0
        %585 = vmatpush.bf16.msra.mxu0 0
        %586 = vmatpush.bf16.msra.mxu0 %v573
        %587 = vmatmul.bf16.gmra.mxu0 %v577
        %v588 = vpop.f32.mrf.mxu0
        %v589 = vadd.f32 0.0, %v588
        %v590 = vpop.f32.mrf.mxu0
        %591 = vdwg.mxu0
        %592 = vmatpush.bf16.msra.mxu0 0
        %593 = vmatpush.bf16.msra.mxu0 0
        %594 = vmatpush.bf16.msra.mxu0 0
        %595 = vmatpush.bf16.msra.mxu0 0
        %596 = vmatpush.bf16.msra.mxu0 0
        %597 = vmatpush.bf16.msra.mxu0 0
        %598 = vmatpush.bf16.msra.mxu0 0
        %599 = vmatpush.bf16.msra.mxu0 %v574
        %600 = vmatmul.bf16.gmra.mxu0 %v577
        %v601 = vpop.f32.mrf.mxu0
        %v602 = vadd.f32 0.0, %v601
        %v603 = vpop.f32.mrf.mxu0
        %604 = vdwg.mxu0
        %v607 = vrot.slane %v602, 4
        %vm608 = vcmask 1043456
        %v609 = vsel %vm608, %v589, %v607
        %v611 = vadd.f32 %v571, %v609
        %612 = vst [vmem:[#allocation2] sm:$0xff] %v611
        // Predicated region
        $region45: #{tpu_custom_call.1} parent=39 // pred_check
          %p613 = pneg %p323
        $region46: #{tpu_custom_call.1} parent=39 // pred_check_branch
          %615 = sbr.rel (%p613) target = $region48
        $region47: #{tpu_custom_call.1} parent=39 // pred_region
          %v616 = vld [vmem:[#allocation2] sm:$0xff]
          %v617 = vld [vmem:[%s4] sm:$0xf]
          %619 = vset.pattern.permute.xlu0 0
          %620 = vperm.xlu0 %619, %v617
          %v621 = vpop.permute.xlu0 %620
          %v623 = vunpack.c.l.s4 839922192
          %v624 = vunpack.c.0.s8 %v623
          %v625 = vperm.slane %v621, %v624
          %v627 = vadd.f32 %v616, %v625
          %628 = vst [vmem:[%s294] sm:$0xff] %v627
        $region48: #{tpu_custom_call.1} parent=39 // pred_fallthru
          _
        %s629 = sand.u32 %s175, 1
        %s630 = scalar_lea.sflag [#allocation4], %s629
        %s631 = sand.u32 %s175, 1
        %s632 = smul.addr %s631, 8
        %s633 = scalar_lea.vmem [#allocation3], %s632
        // Predicated region
        $region49: #{tpu_custom_call.1} parent=39 // pred_check
          %p634 = pneg %p185
        $region50: #{tpu_custom_call.1} parent=39 // pred_check_branch
          %636 = sbr.rel (%p634) target = $region52
        $region51: #{tpu_custom_call.1} parent=39 // pred_region
          %s637 = smul.u32 2, %s25
          %639 = vsyncadd %s630, 0
          %s640 = smul.addr %s24, 2
          %s641 = sadd.s32 %s637, %s640
          %s642 = smul.addr %s641, 4
          %s643 = scalar_lea.hbm %s5, %s642
          %s645 = sshll.u32 %s633, 4
          %s646 = int_to_ptr.vmem [resolvable:$true] %s645
          %s647 = sshll.u32 %s643, 4
          %s648 = int_to_ptr.hbm [resolvable:$true] %s647
          %650 = dma.vmem_to_hbm [thread:$0]  %s646, 128, %s648, %s630
        $region52: #{tpu_custom_call.1} parent=39 // pred_fallthru
          _
      $region40: #{tpu_custom_call.1} parent=5 // pred_fallthru
        _
      %p651 = scmp.le.s32.totalorder 2, %s14
      // Predicated region
      $region53: #{tpu_custom_call.1} parent=5 // pred_check
        %p652 = pneg %p651
      $region54: #{tpu_custom_call.1} parent=5 // pred_check_branch
        %654 = sbr.rel (%p652) target = $region56
      $region55: #{tpu_custom_call.1} parent=5 // pred_region
        %s655 = ssub.s32 %s14, 2
        // Predicated region
        $region57: #{tpu_custom_call.1} parent=55 // pred_check
          %p656 = pneg %p191
        $region58: #{tpu_custom_call.1} parent=55 // pred_check_branch
          %658 = sbr.rel (%p656) target = $region60
        $region59: #{tpu_custom_call.1} parent=55 // pred_region
          %s659 = sand.u32 %s176, 1
          %s660 = scalar_lea.sflag [#allocation4], %s659
          %s661 = sand.u32 %s176, 1
          %s662 = smul.addr %s661, 8
          %s663 = scalar_lea.vmem [#allocation3], %s662
          %665 = dma.done %s660, 128
        $region60: #{tpu_custom_call.1} parent=55 // pred_fallthru
          _
      $region56: #{tpu_custom_call.1} parent=5 // pred_fallthru
        _
    $region6: #{tpu_custom_call.1} parent=1 // loop_footer
      %s18 = sadd.s32 1, %s14
    $region7: #{tpu_custom_call.1} parent=1 // loop_footer_branch
      %13 = sbr.rel target = $region3
    $region8: #{tpu_custom_call.1} parent=1 // loop_exit
      _
    %666 = vsyncpa [#allocation4], 1
    %s667 = scalar_lea.sflag [#allocation4], 1
    %668 = vsyncpa %s667, 1

</llo_original>
